<compile_context>
chip_gen: v6e
topology: v6e:2x2x1
jax: 0.10.0
libtpu: 0.0.40
codegen_flags: <defaults>
</compile_context>

<pallas_src>
import math

import jax
import jax.numpy as jnp
from jax.experimental import pallas as pl
from jax.experimental.pallas import tpu as pltpu


OUT_PAD = 128  # lane-dense output width (q lives in the first action_dim columns)


# ----------------------------------------------------------------------------
# Pallas kernel: one batch tile of the full Rainbow forward.
# ----------------------------------------------------------------------------
def rainbow_kernel(
    x_ref,        # (B_tile, S)        bf16
    w_feat_ref,   # (S, H)             bf16
    b_feat_ref,   # (1, H)             f32
    w_h1_ref,     # (H, 2H)  = [w_adv1 | w_val1]                bf16
    b_h1_ref,     # (1, 2H)            f32
    w_q_ref,      # (2H, A*N) = blockdiag(w_adv2, w_val2) @ p_comb (folded)   bf16
    b_q_ref,      # (1, A*N)           f32
    seg_sum_ref,  # (A*N, A*N)  per-action segment-sum broadcast matrix       f32
    s_mat_ref,    # (A*N, OUT_PAD) support-expectation matrix (zero padded)   f32
    q_ref,        # (B_tile, OUT_PAD)  f32
):
    # feature = ReLU(x @ W_feat + b)          -- bf16 operands, f32 accumulation
    feat = jnp.dot(x_ref[...], w_feat_ref[...], preferred_element_type=jnp.float32)
    feat = jnp.maximum(feat + b_feat_ref[...], 0.0)                       # (B, H) f32

    # fused hidden layers of both heads: ReLU(feat @ [w_adv1 | w_val1] + b)
    h = jnp.dot(feat.astype(w_h1_ref.dtype), w_h1_ref[...],
                preferred_element_type=jnp.float32)
    h = jnp.maximum(h + b_h1_ref[...], 0.0)                               # (B, 2H) f32

    # fused output layers with the dueling combination pre-folded into w_q / b_q:
    #   q_atoms[b, a*N+n] = val[b,n] + adv[b,a,n] - mean_a'(adv[b,a',n])
    q_atoms = jnp.dot(h.astype(w_q_ref.dtype), w_q_ref[...],
                      preferred_element_type=jnp.float32)
    q_atoms = q_atoms + b_q_ref[...]                                      # (B, A*N) f32

    # per-action softmax over atoms on the flat layout.  A single row-wide max is a
    # valid per-segment-constant shift; seg is clamped so an underflowed segment can
    # never feed the approximate reciprocal with exactly 0.
    m = jnp.max(q_atoms, axis=-1, keepdims=True)
    e = jnp.exp(q_atoms - m)                                              # (B, A*N)
    seg = jnp.dot(e, seg_sum_ref[...], preferred_element_type=jnp.float32)
    seg = jnp.maximum(seg, 1e-30)
    dist = e * pl.reciprocal(seg, approx=True)
    dist = jnp.maximum(dist, 0.001)                                       # clamp(min=0.001)

    # expected value under the support, written as a lane-dense (B, 128) slab.
    q_ref[...] = jnp.dot(dist, s_mat_ref[...], preferred_element_type=jnp.float32)


# ----------------------------------------------------------------------------
# Wrapper-side weight fusion (also used by the precision-matched reference).
# ----------------------------------------------------------------------------
def fuse_rainbow_params(params, support, *, action_dim, atom_size,
                        compute_dtype=jnp.bfloat16):
    A, N = action_dim, atom_size
    AN = A * N
    f32 = jnp.float32

    idx = jnp.arange(AN)
    n_of = idx % N          # atom index of flat column
    a_of = idx // N         # action index of flat column

    # dueling combination on the flat (A*N) layout:
    #   center: adv -> adv - mean_over_actions(adv);  tile: broadcast val[n] to every action
    center = jnp.eye(AN, dtype=f32) - (n_of[:, None] == n_of[None, :]).astype(f32) / A
    tile = (jnp.arange(N)[:, None] == n_of[None, :]).astype(f32)          # (N, AN)

    # fuse the two hidden NoisyLinear layers into one matmul
    w_h1 = jnp.concatenate([params["w_adv1"], params["w_val1"]], axis=1)  # (H, 2H)
    b_h1 = jnp.concatenate([params["b_adv1"], params["b_val1"]], axis=1)  # (1, 2H)

    # fold the dueling-combination matmul into the (block-diagonal) output weights
    w_q = jnp.concatenate([params["w_adv2"].astype(f32) @ center,
                           params["w_val2"].astype(f32) @ tile], axis=0)  # (2H, AN)
    b_q = params["b_adv2"].astype(f32) @ center + params["b_val2"].astype(f32) @ tile

    seg_sum = (a_of[:, None] == a_of[None, :]).astype(f32)                # (AN, AN)
    s_mat = jnp.zeros((AN, OUT_PAD), f32)
    s_mat = s_mat.at[idx, a_of].set(jnp.tile(support.astype(f32), A))     # (AN, OUT_PAD)

    return dict(
        w_feat=params["w_feat"].astype(compute_dtype),
        b_feat=params["b_feat"].astype(f32),
        w_h1=w_h1.astype(compute_dtype),
        b_h1=b_h1.astype(f32),
        w_q=w_q.astype(compute_dtype),
        b_q=b_q.astype(f32),
        seg_sum=seg_sum,
        s_mat=s_mat,
    )


def _pick_b_tile(batch):
    # tiny batch: one sublane-aligned tile.  batch < 512: 128-row tiles keep >=2 grid
    # steps so the "parallel" axis uses both v7x TensorCores.  Large batch: 256-row
    # tiles fill the 256-wide MXU rows on v6e/v7x.
    if batch <= 128:
        return -(-batch // 8) * 8
    if batch < 512:
        return 128
    return 256


def rainbow_forward(x, params, support, *, action_dim, atom_size,
                    b_tile=None, compute_dtype=jnp.bfloat16):
    batch, state_dim = x.shape
    fused = fuse_rainbow_params(params, support, action_dim=action_dim,
                                atom_size=atom_size, compute_dtype=compute_dtype)

    if b_tile is None:
        b_tile = _pick_b_tile(batch)
    n_tiles = -(-batch // b_tile)
    pad_b = n_tiles * b_tile

    x = x.astype(compute_dtype)
    if pad_b != batch:
        x = jnp.pad(x, ((0, pad_b - batch), (0, 0)))

    consts = (fused["w_feat"], fused["b_feat"], fused["w_h1"], fused["b_h1"],
              fused["w_q"], fused["b_q"], fused["seg_sum"], fused["s_mat"])

    def const_spec(a):
        return pl.BlockSpec(a.shape, lambda i: (0,) * a.ndim)

    in_specs = [pl.BlockSpec((b_tile, state_dim), lambda i: (i, 0))]
    in_specs += [const_spec(a) for a in consts]
    out_spec = pl.BlockSpec((b_tile, OUT_PAD), lambda i: (i, 0))

    q_pad = pl.pallas_call(
        rainbow_kernel,
        out_shape=jax.ShapeDtypeStruct((pad_b, OUT_PAD), jnp.float32),
        grid=(n_tiles,),
        in_specs=in_specs,
        out_specs=out_spec,
        compiler_params=pltpu.CompilerParams(dimension_semantics=("parallel",)),
    )(x, *consts)

    return q_pad[:batch, :action_dim]


# ----------------------------------------------------------------------------
# Deterministic parameter construction (mirrors nn.Linear / NoisyLinear init).
# Weights are stored pre-transposed as (in, out) so the kernel does x @ W + b.
# ----------------------------------------------------------------------------
def _linear_params(key, fan_in, fan_out):
    kw, kb = jax.random.split(key)
    bound = 1.0 / math.sqrt(fan_in)
    w = jax.random.uniform(kw, (fan_in, fan_out), jnp.float32, -bound, bound)
    b = jax.random.uniform(kb, (1, fan_out), jnp.float32, -bound, bound)
    return w, b


def _noisy_linear_params(key, fan_in, fan_out, std_init=0.5):
    # NoisyLinear: W = W_mu + W_sigma * (eps_out ⊗ eps_in), factorized Gaussian noise.
    kmu_w, kmu_b, ke_in, ke_out = jax.random.split(key, 4)
    mu_range = 1.0 / math.sqrt(fan_in)
    w_mu = jax.random.uniform(kmu_w, (fan_in, fan_out), jnp.float32, -mu_range, mu_range)
    b_mu = jax.random.uniform(kmu_b, (1, fan_out), jnp.float32, -mu_range, mu_range)
    w_sigma = jnp.full((fan_in, fan_out), std_init / math.sqrt(fan_in), jnp.float32)
    b_sigma = jnp.full((1, fan_out), std_init / math.sqrt(fan_out), jnp.float32)

    def scale_noise(k, n):
        e = jax.random.normal(k, (n,), jnp.float32)
        return jnp.sign(e) * jnp.sqrt(jnp.abs(e))

    eps_in = scale_noise(ke_in, fan_in)
    eps_out = scale_noise(ke_out, fan_out)
    w_eps = jnp.outer(eps_in, eps_out)          # (in, out) -- matches transposed layout
    b_eps = eps_out[None, :]
    return w_mu + w_sigma * w_eps, b_mu + b_sigma * b_eps


if __name__ == "__main__":
    # hidden_dim=128 (module default); realistic RL replay batch so the grid is exercised.
    batch = 256
    state_dim = 16
    hidden_dim = 128
    action_dim = 4
    atom_size = 8

    key = jax.random.PRNGKey(0)
    (k_x, k_feat, k_adv1, k_adv2, k_val1, k_val2) = jax.random.split(key, 6)

    x = jax.random.normal(k_x, (batch, state_dim), jnp.float32)
    support = jnp.linspace(-10.0, 10.0, atom_size, dtype=jnp.float32)

    w_feat, b_feat = _linear_params(k_feat, state_dim, hidden_dim)
    w_adv1, b_adv1 = _noisy_linear_params(k_adv1, hidden_dim, hidden_dim)
    w_adv2, b_adv2 = _noisy_linear_params(k_adv2, hidden_dim, action_dim * atom_size)
    w_val1, b_val1 = _noisy_linear_params(k_val1, hidden_dim, hidden_dim)
    w_val2, b_val2 = _noisy_linear_params(k_val2, hidden_dim, atom_size)

    params = dict(
        w_feat=w_feat, b_feat=b_feat,
        w_adv1=w_adv1, b_adv1=b_adv1,
        w_adv2=w_adv2, b_adv2=b_adv2,
        w_val1=w_val1, b_val1=b_val1,
        w_val2=w_val2, b_val2=b_val2,
    )

    q = rainbow_forward(x, params, support, action_dim=action_dim, atom_size=atom_size)
    q = jax.block_until_ready(q)
    assert q.shape == (batch, action_dim)

    # --- reference A: precision-matched (same fused bf16 operands, f32 accumulation).
    # Only the approximate reciprocal and MXU-vs-XLA accumulation order differ.
    fused = fuse_rainbow_params(params, support, action_dim=action_dim, atom_size=atom_size)
    xb = x.astype(jnp.bfloat16)
    feat = jnp.maximum(jnp.dot(xb, fused["w_feat"], preferred_element_type=jnp.float32)
                       + fused["b_feat"], 0.0)
    h = jnp.maximum(jnp.dot(feat.astype(jnp.bfloat16), fused["w_h1"],
                            preferred_element_type=jnp.float32) + fused["b_h1"], 0.0)
    qa = (jnp.dot(h.astype(jnp.bfloat16), fused["w_q"],
                  preferred_element_type=jnp.float32) + fused["b_q"])
    qa = qa.reshape(batch, action_dim, atom_size)
    dist_a = jnp.maximum(jax.nn.softmax(qa, axis=-1), 0.001)
    q_ref_matched = jnp.sum(dist_a * support[None, None, :], axis=2)

    # --- reference B: original module math, all f32 (bounds the bf16 operand trade-off
    # endorsed by the perf review).
    feat32 = jnp.maximum(x @ w_feat + b_feat, 0.0)
    adv = jnp.maximum(feat32 @ w_adv1 + b_adv1, 0.0) @ w_adv2 + b_adv2
    adv = adv.reshape(batch, action_dim, atom_size)
    val = (jnp.maximum(feat32 @ w_val1 + b_val1, 0.0) @ w_val2 + b_val2)[:, None, :]
    q_atoms = val + adv - adv.mean(axis=1, keepdims=True)
    dist_b = jnp.maximum(jax.nn.softmax(q_atoms, axis=-1), 0.001)
    q_ref_f32 = jnp.sum(dist_b * support[None, None, :], axis=2)

    assert jnp.allclose(q, q_ref_matched, atol=2e-2, rtol=2e-3), \
        "mismatch vs precision-matched reference"
    assert jnp.allclose(q, q_ref_f32, atol=2.5e-1, rtol=2e-2), \
        "mismatch vs f32 module reference (bf16 trade-off bound)"

    print("KERNEL_OK")
</pallas_src>

<mosaic_0001>
module attributes {stable_mosaic.version = 11 : i64} {
  func.func @rainbow_kernel(%arg0: i32, %arg1: memref<128x16xbf16, #tpu.memory_space<vmem>>, %arg2: memref<16x128xbf16, #tpu.memory_space<vmem>>, %arg3: memref<1x128xf32, #tpu.memory_space<vmem>>, %arg4: memref<128x256xbf16, #tpu.memory_space<vmem>>, %arg5: memref<1x256xf32, #tpu.memory_space<vmem>>, %arg6: memref<256x32xbf16, #tpu.memory_space<vmem>>, %arg7: memref<1x32xf32, #tpu.memory_space<vmem>>, %arg8: memref<32x32xf32, #tpu.memory_space<vmem>>, %arg9: memref<32x128xf32, #tpu.memory_space<vmem>>, %arg10: memref<128x128xf32, #tpu.memory_space<vmem>>) attributes {dimension_semantics = [#tpu.dimension_semantics<parallel>], iteration_bounds = array<i64: 2>, scalar_prefetch = 0 : i64, scratch_operands = 0 : i64, tpu.core_type = #tpu.core_type<tc>, window_params = [{transform_indices = @transform_0, window_bounds = array<i64: 128, 16>}, {pipeline_mode = #tpu.pipeline_mode<synchronous>, transform_indices = @transform_1, window_bounds = array<i64: 16, 128>}, {pipeline_mode = #tpu.pipeline_mode<synchronous>, transform_indices = @transform_2, window_bounds = array<i64: 1, 128>}, {pipeline_mode = #tpu.pipeline_mode<synchronous>, transform_indices = @transform_3, window_bounds = array<i64: 128, 256>}, {pipeline_mode = #tpu.pipeline_mode<synchronous>, transform_indices = @transform_4, window_bounds = array<i64: 1, 256>}, {pipeline_mode = #tpu.pipeline_mode<synchronous>, transform_indices = @transform_5, window_bounds = array<i64: 256, 32>}, {pipeline_mode = #tpu.pipeline_mode<synchronous>, transform_indices = @transform_6, window_bounds = array<i64: 1, 32>}, {pipeline_mode = #tpu.pipeline_mode<synchronous>, transform_indices = @transform_7, window_bounds = array<i64: 32, 32>}, {pipeline_mode = #tpu.pipeline_mode<synchronous>, transform_indices = @transform_8, window_bounds = array<i64: 32, 128>}, {transform_indices = @transform_9, window_bounds = array<i64: 128, 128>}]} {
    %c0 = arith.constant 0 : index
    %c0_0 = arith.constant 0 : index
    %0 = vector.load %arg1[%c0, %c0_0] : memref<128x16xbf16, #tpu.memory_space<vmem>>, vector<128x16xbf16>
    %c0_1 = arith.constant 0 : index
    %c0_2 = arith.constant 0 : index
    %1 = vector.load %arg2[%c0_1, %c0_2] : memref<16x128xbf16, #tpu.memory_space<vmem>>, vector<16x128xbf16>
    %cst = arith.constant dense<0.000000e+00> : vector<128x128xf32>
    %2 = tpu.matmul %0, %1, %cst {dimension_numbers = #tpu.dot_dimension_numbers<[1], [0], [0], [1], [0, 0, 1, 1], [], []>} : vector<128x16xbf16>, vector<16x128xbf16>, vector<128x128xf32> -> vector<128x128xf32>
    %c0_3 = arith.constant 0 : index
    %c0_4 = arith.constant 0 : index
    %3 = vector.load %arg3[%c0_3, %c0_4] : memref<1x128xf32, #tpu.memory_space<vmem>>, vector<1x128xf32>
    %4 = vector.broadcast %3 : vector<1x128xf32> to vector<128x128xf32>
    %5 = arith.addf %2, %4 : vector<128x128xf32>
    %cst_5 = arith.constant 0.000000e+00 : f32
    %6 = vector.broadcast %cst_5 : f32 to vector<128x128xf32>
    %7 = arith.maximumf %5, %6 : vector<128x128xf32>
    %8 = arith.truncf %7 : vector<128x128xf32> to vector<128x128xbf16>
    %c0_6 = arith.constant 0 : index
    %c0_7 = arith.constant 0 : index
    %9 = vector.load %arg4[%c0_6, %c0_7] : memref<128x256xbf16, #tpu.memory_space<vmem>>, vector<128x256xbf16>
    %cst_8 = arith.constant dense<0.000000e+00> : vector<128x256xf32>
    %10 = tpu.matmul %8, %9, %cst_8 {dimension_numbers = #tpu.dot_dimension_numbers<[1], [0], [0], [1], [0, 0, 1, 1], [], []>} : vector<128x128xbf16>, vector<128x256xbf16>, vector<128x256xf32> -> vector<128x256xf32>
    %c0_9 = arith.constant 0 : index
    %c0_10 = arith.constant 0 : index
    %11 = vector.load %arg5[%c0_9, %c0_10] : memref<1x256xf32, #tpu.memory_space<vmem>>, vector<1x256xf32>
    %12 = vector.broadcast %11 : vector<1x256xf32> to vector<128x256xf32>
    %13 = arith.addf %10, %12 : vector<128x256xf32>
    %cst_11 = arith.constant 0.000000e+00 : f32
    %14 = vector.broadcast %cst_11 : f32 to vector<128x256xf32>
    %15 = arith.maximumf %13, %14 : vector<128x256xf32>
    %16 = arith.truncf %15 : vector<128x256xf32> to vector<128x256xbf16>
    %c0_12 = arith.constant 0 : index
    %c0_13 = arith.constant 0 : index
    %17 = vector.load %arg6[%c0_12, %c0_13] : memref<256x32xbf16, #tpu.memory_space<vmem>>, vector<256x32xbf16>
    %cst_14 = arith.constant dense<0.000000e+00> : vector<128x32xf32>
    %18 = tpu.matmul %16, %17, %cst_14 {dimension_numbers = #tpu.dot_dimension_numbers<[1], [0], [0], [1], [0, 0, 1, 1], [], []>} : vector<128x256xbf16>, vector<256x32xbf16>, vector<128x32xf32> -> vector<128x32xf32>
    %c0_15 = arith.constant 0 : index
    %c0_16 = arith.constant 0 : index
    %19 = vector.load %arg7[%c0_15, %c0_16] : memref<1x32xf32, #tpu.memory_space<vmem>>, vector<1x32xf32>
    %20 = vector.broadcast %19 : vector<1x32xf32> to vector<128x32xf32>
    %21 = arith.addf %18, %20 : vector<128x32xf32>
    %cst_17 = arith.constant dense<0xFF800000> : vector<128xf32>
    %22 = vector.multi_reduction <maximumf>, %21, %cst_17 [1] : vector<128x32xf32> to vector<128xf32>
    %23 = vector.shape_cast %22 : vector<128xf32> to vector<128x1xf32>
    %24 = vector.broadcast %23 : vector<128x1xf32> to vector<128x32xf32>
    %25 = arith.subf %21, %24 : vector<128x32xf32>
    %26 = math.exp %25 : vector<128x32xf32>
    %c0_18 = arith.constant 0 : index
    %c0_19 = arith.constant 0 : index
    %27 = vector.load %arg8[%c0_18, %c0_19] : memref<32x32xf32, #tpu.memory_space<vmem>>, vector<32x32xf32>
    %cst_20 = arith.constant dense<0.000000e+00> : vector<128x32xf32>
    %28 = tpu.matmul %26, %27, %cst_20 {dimension_numbers = #tpu.dot_dimension_numbers<[1], [0], [0], [1], [0, 0, 1, 1], [], []>} : vector<128x32xf32>, vector<32x32xf32>, vector<128x32xf32> -> vector<128x32xf32>
    %cst_21 = arith.constant 1.000000e-30 : f32
    %29 = vector.broadcast %cst_21 : f32 to vector<128x32xf32>
    %30 = arith.maximumf %28, %29 : vector<128x32xf32>
    %31 = tpu.reciprocal %30 {approx = true} : vector<128x32xf32> -> vector<128x32xf32>
    %32 = arith.mulf %26, %31 : vector<128x32xf32>
    %cst_22 = arith.constant 1.000000e-03 : f32
    %33 = vector.broadcast %cst_22 : f32 to vector<128x32xf32>
    %34 = arith.maximumf %32, %33 : vector<128x32xf32>
    %c0_23 = arith.constant 0 : index
    %c0_24 = arith.constant 0 : index
    %35 = vector.load %arg9[%c0_23, %c0_24] : memref<32x128xf32, #tpu.memory_space<vmem>>, vector<32x128xf32>
    %cst_25 = arith.constant dense<0.000000e+00> : vector<128x128xf32>
    %36 = tpu.matmul %34, %35, %cst_25 {dimension_numbers = #tpu.dot_dimension_numbers<[1], [0], [0], [1], [0, 0, 1, 1], [], []>} : vector<128x32xf32>, vector<32x128xf32>, vector<128x128xf32> -> vector<128x128xf32>
    %c0_26 = arith.constant 0 : index
    %c0_27 = arith.constant 0 : index
    %37 = vector.load %arg10[%c0_26, %c0_27] : memref<128x128xf32, #tpu.memory_space<vmem>>, vector<128x128xf32>
    tpu.vector_store %arg10[%c0_26, %c0_27], %36 {strides = array<i32>} : memref<128x128xf32, #tpu.memory_space<vmem>>, vector<128x128xf32>,
    return
  }
  func.func @transform_0(%arg0: i32) -> (i32, i32) {
    %c0_i32 = arith.constant 0 : i32
    %c0_i32_0 = arith.constant 0 : i32
    return %arg0, %c0_i32 : i32, i32
  }
  func.func @transform_1(%arg0: i32) -> (i32, i32) {
    %c0_i32 = arith.constant 0 : i32
    %c0_i32_0 = arith.constant 0 : i32
    %c0_i32_1 = arith.constant 0 : i32
    return %c0_i32, %c0_i32_0 : i32, i32
  }
  func.func @transform_2(%arg0: i32) -> (i32, i32) {
    %c0_i32 = arith.constant 0 : i32
    %c0_i32_0 = arith.constant 0 : i32
    %c0_i32_1 = arith.constant 0 : i32
    return %c0_i32, %c0_i32_0 : i32, i32
  }
  func.func @transform_3(%arg0: i32) -> (i32, i32) {
    %c0_i32 = arith.constant 0 : i32
    %c0_i32_0 = arith.constant 0 : i32
    %c0_i32_1 = arith.constant 0 : i32
    return %c0_i32, %c0_i32_0 : i32, i32
  }
  func.func @transform_4(%arg0: i32) -> (i32, i32) {
    %c0_i32 = arith.constant 0 : i32
    %c0_i32_0 = arith.constant 0 : i32
    %c0_i32_1 = arith.constant 0 : i32
    return %c0_i32, %c0_i32_0 : i32, i32
  }
  func.func @transform_5(%arg0: i32) -> (i32, i32) {
    %c0_i32 = arith.constant 0 : i32
    %c0_i32_0 = arith.constant 0 : i32
    %c0_i32_1 = arith.constant 0 : i32
    return %c0_i32, %c0_i32_0 : i32, i32
  }
  func.func @transform_6(%arg0: i32) -> (i32, i32) {
    %c0_i32 = arith.constant 0 : i32
    %c0_i32_0 = arith.constant 0 : i32
    %c0_i32_1 = arith.constant 0 : i32
    return %c0_i32, %c0_i32_0 : i32, i32
  }
  func.func @transform_7(%arg0: i32) -> (i32, i32) {
    %c0_i32 = arith.constant 0 : i32
    %c0_i32_0 = arith.constant 0 : i32
    %c0_i32_1 = arith.constant 0 : i32
    return %c0_i32, %c0_i32_0 : i32, i32
  }
  func.func @transform_8(%arg0: i32) -> (i32, i32) {
    %c0_i32 = arith.constant 0 : i32
    %c0_i32_0 = arith.constant 0 : i32
    %c0_i32_1 = arith.constant 0 : i32
    return %c0_i32, %c0_i32_0 : i32, i32
  }
  func.func @transform_9(%arg0: i32) -> (i32, i32) {
    %c0_i32 = arith.constant 0 : i32
    %c0_i32_0 = arith.constant 0 : i32
    return %arg0, %c0_i32 : i32, i32
  }
}

</mosaic_0001>

<llo_original>
// kernel: tpu_custom_call.1
$region0: #{tpu_custom_call.1}
  #allocation0 [shape = 'u32[]', space=smem, size = 0x4, offset = 0x4, fixed_abs, tag = 'smem constant byte address 0x4 - core index']
  #allocation1 [shape = 'u32[144,128]{1,0:T(1,128)}', space=vmem, size = 0x12000, scoped, tag = 'internal scratch']
  %s0 = inlined_call_operand.vmem [shape: bf16[256,16], index: 0, kind: input, shape index: {}]
  %s1 = inlined_call_operand.vmem [shape: bf16[16,128], index: 1, kind: input, shape index: {}]
  %s2 = inlined_call_operand.vmem [shape: f32[1,128], index: 2, kind: input, shape index: {}]
  %s3 = inlined_call_operand.vmem [shape: bf16[128,256], index: 3, kind: input, shape index: {}]
  %s4 = inlined_call_operand.vmem [shape: f32[1,256], index: 4, kind: input, shape index: {}]
  %s5 = inlined_call_operand.vmem [shape: bf16[256,32], index: 5, kind: input, shape index: {}]
  %s6 = inlined_call_operand.vmem [shape: f32[1,32], index: 6, kind: input, shape index: {}]
  %s7 = inlined_call_operand.vmem [shape: f32[32,32], index: 7, kind: input, shape index: {}]
  %s8 = inlined_call_operand.vmem [shape: f32[32,128], index: 8, kind: input, shape index: {}]
  %s9 = inlined_call_operand.hbm [shape: f32[256,128], index: 9, kind: output, shape index: {}]
  %s10 = sld [smem:[#allocation0]]
  $region69: #{tpu_custom_call.1} parent=0
    _
  %s12 = ssub.s32 1, %s10
  %s13 = scalar_select 0, %s12, %s10
  $region1: #{tpu_custom_call.1} parent=0
    #allocation2 [shape = 'u8[131072]{0}', space=vmem, size = 0x20000, scoped, tag = 'output window, operand 0']
    #allocation3 [shape = 's32[2]{0}', space=sflag, size = 0x8, scoped, tag = 'scoped memory for tpu_custom_call.1']
    %14 = vsyncpa [#allocation3], 0
    %s15 = scalar_lea.sflag [#allocation3], 1
    %16 = vsyncpa %s15, 0
    loop: start=0, step=1, limit=4
    $region2: #{tpu_custom_call.1} parent=1 // loop_pre_header
      _
    $region3: #{tpu_custom_call.1} parent=1 // loop_header
      %s18 = sphi 0, %s22
      %p19 = scmp.ge.s32.totalorder %s18, 4
      %s28 = sphi 0, %s30
      %s31 = sphi 0, %s28
      %s32 = sphi 0, %s31
      %s48 = sphi 0, %s32
      %s52 = sphi 0, %s52
      %s54 = sphi 0, %s52
      %s55 = sphi 0, %s54
      %s69 = sphi 0, %s55
      %s73 = sphi 0, %s73
      %s75 = sphi 0, %s73
      %s76 = sphi 0, %s75
      %s90 = sphi 0, %s76
      %s94 = sphi 0, %s94
      %s96 = sphi 0, %s94
      %s97 = sphi 0, %s96
      %s111 = sphi 0, %s97
      %s115 = sphi 0, %s115
      %s117 = sphi 0, %s115
      %s118 = sphi 0, %s117
      %s132 = sphi 0, %s118
      %s136 = sphi 0, %s136
      %s138 = sphi 0, %s136
      %s139 = sphi 0, %s138
      %s153 = sphi 0, %s139
      %s157 = sphi 0, %s157
      %s159 = sphi 0, %s157
      %s160 = sphi 0, %s159
      %s174 = sphi 0, %s160
      %s178 = sphi 0, %s178
      %s180 = sphi 0, %s178
      %s181 = sphi 0, %s180
      %s195 = sphi 0, %s181
      %s199 = sphi 0, %s199
      %s201 = sphi 0, %s199
      %s202 = sphi 0, %s201
      %s216 = sphi 0, %s202
      %s222 = sphi 0, %s224
      %s225 = sphi 0, %s222
      %s226 = sphi 0, %s225
      %s242 = sphi 0, %s226
    $region4: #{tpu_custom_call.1} parent=1 // loop_header_branch
      %21 = sbr.rel (%p19) target = $region8
    $region5: #{tpu_custom_call.1} parent=1 // loop_body
      %s23 = ssub.s32 %s18, 1
      %s24 = ssub.s32 %s18, 2
      %s25 = sadd.s32 %s18, 1
      %s26 = ssub.s32 %s18, %s25
      %p27 = scmp.eq.s32.totalorder %s26, 0
      %s29 = sadd.s32 %s28, 1
      %s30 = scalar_select %p27, %s28, %s29
      %p33 = pneg %p27
      %p34 = scmp.eq.s32.totalorder %s18, 1
      %p35 = por %p33, %p34
      %p36 = scmp.ne.s32.totalorder %s28, %s31
      %p37 = scmp.eq.s32.totalorder %s18, 0
      %p38 = por %p36, %p37
      %p39 = scmp.ne.s32.totalorder %s28, %s31
      %p40 = scmp.eq.s32.totalorder %s23, 1
      %p41 = por %p39, %p40
      %p42 = scmp.ne.s32.totalorder %s31, %s32
      %p43 = scmp.eq.s32.totalorder %s23, 0
      %p44 = por %p42, %p43
      %p45 = scmp.ne.s32.totalorder %s31, %s32
      %p46 = scmp.eq.s32.totalorder %s24, 1
      %p47 = por %p45, %p46
      %p49 = scmp.ne.s32.totalorder %s32, %s48
      %p50 = scmp.eq.s32.totalorder %s24, 0
      %p51 = por %p49, %p50
      %s53 = sadd.s32 %s52, 1
      %p56 = scmp.eq.s32.totalorder %s18, 1
      %p57 = scmp.ne.s32.totalorder %s52, %s54
      %p58 = scmp.eq.s32.totalorder %s18, 0
      %p59 = por %p57, %p58
      %p60 = scmp.ne.s32.totalorder %s52, %s54
      %p61 = scmp.eq.s32.totalorder %s23, 1
      %p62 = por %p60, %p61
      %p63 = scmp.ne.s32.totalorder %s54, %s55
      %p64 = scmp.eq.s32.totalorder %s23, 0
      %p65 = por %p63, %p64
      %p66 = scmp.ne.s32.totalorder %s54, %s55
      %p67 = scmp.eq.s32.totalorder %s24, 1
      %p68 = por %p66, %p67
      %p70 = scmp.ne.s32.totalorder %s55, %s69
      %p71 = scmp.eq.s32.totalorder %s24, 0
      %p72 = por %p70, %p71
      %s74 = sadd.s32 %s73, 1
      %p77 = scmp.eq.s32.totalorder %s18, 1
      %p78 = scmp.ne.s32.totalorder %s73, %s75
      %p79 = scmp.eq.s32.totalorder %s18, 0
      %p80 = por %p78, %p79
      %p81 = scmp.ne.s32.totalorder %s73, %s75
      %p82 = scmp.eq.s32.totalorder %s23, 1
      %p83 = por %p81, %p82
      %p84 = scmp.ne.s32.totalorder %s75, %s76
      %p85 = scmp.eq.s32.totalorder %s23, 0
      %p86 = por %p84, %p85
      %p87 = scmp.ne.s32.totalorder %s75, %s76
      %p88 = scmp.eq.s32.totalorder %s24, 1
      %p89 = por %p87, %p88
      %p91 = scmp.ne.s32.totalorder %s76, %s90
      %p92 = scmp.eq.s32.totalorder %s24, 0
      %p93 = por %p91, %p92
      %s95 = sadd.s32 %s94, 1
      %p98 = scmp.eq.s32.totalorder %s18, 1
      %p99 = scmp.ne.s32.totalorder %s94, %s96
      %p100 = scmp.eq.s32.totalorder %s18, 0
      %p101 = por %p99, %p100
      %p102 = scmp.ne.s32.totalorder %s94, %s96
      %p103 = scmp.eq.s32.totalorder %s23, 1
      %p104 = por %p102, %p103
      %p105 = scmp.ne.s32.totalorder %s96, %s97
      %p106 = scmp.eq.s32.totalorder %s23, 0
      %p107 = por %p105, %p106
      %p108 = scmp.ne.s32.totalorder %s96, %s97
      %p109 = scmp.eq.s32.totalorder %s24, 1
      %p110 = por %p108, %p109
      %p112 = scmp.ne.s32.totalorder %s97, %s111
      %p113 = scmp.eq.s32.totalorder %s24, 0
      %p114 = por %p112, %p113
      %s116 = sadd.s32 %s115, 1
      %p119 = scmp.eq.s32.totalorder %s18, 1
      %p120 = scmp.ne.s32.totalorder %s115, %s117
      %p121 = scmp.eq.s32.totalorder %s18, 0
      %p122 = por %p120, %p121
      %p123 = scmp.ne.s32.totalorder %s115, %s117
      %p124 = scmp.eq.s32.totalorder %s23, 1
      %p125 = por %p123, %p124
      %p126 = scmp.ne.s32.totalorder %s117, %s118
      %p127 = scmp.eq.s32.totalorder %s23, 0
      %p128 = por %p126, %p127
      %p129 = scmp.ne.s32.totalorder %s117, %s118
      %p130 = scmp.eq.s32.totalorder %s24, 1
      %p131 = por %p129, %p130
      %p133 = scmp.ne.s32.totalorder %s118, %s132
      %p134 = scmp.eq.s32.totalorder %s24, 0
      %p135 = por %p133, %p134
      %s137 = sadd.s32 %s136, 1
      %p140 = scmp.eq.s32.totalorder %s18, 1
      %p141 = scmp.ne.s32.totalorder %s136, %s138
      %p142 = scmp.eq.s32.totalorder %s18, 0
      %p143 = por %p141, %p142
      %p144 = scmp.ne.s32.totalorder %s136, %s138
      %p145 = scmp.eq.s32.totalorder %s23, 1
      %p146 = por %p144, %p145
      %p147 = scmp.ne.s32.totalorder %s138, %s139
      %p148 = scmp.eq.s32.totalorder %s23, 0
      %p149 = por %p147, %p148
      %p150 = scmp.ne.s32.totalorder %s138, %s139
      %p151 = scmp.eq.s32.totalorder %s24, 1
      %p152 = por %p150, %p151
      %p154 = scmp.ne.s32.totalorder %s139, %s153
      %p155 = scmp.eq.s32.totalorder %s24, 0
      %p156 = por %p154, %p155
      %s158 = sadd.s32 %s157, 1
      %p161 = scmp.eq.s32.totalorder %s18, 1
      %p162 = scmp.ne.s32.totalorder %s157, %s159
      %p163 = scmp.eq.s32.totalorder %s18, 0
      %p164 = por %p162, %p163
      %p165 = scmp.ne.s32.totalorder %s157, %s159
      %p166 = scmp.eq.s32.totalorder %s23, 1
      %p167 = por %p165, %p166
      %p168 = scmp.ne.s32.totalorder %s159, %s160
      %p169 = scmp.eq.s32.totalorder %s23, 0
      %p170 = por %p168, %p169
      %p171 = scmp.ne.s32.totalorder %s159, %s160
      %p172 = scmp.eq.s32.totalorder %s24, 1
      %p173 = por %p171, %p172
      %p175 = scmp.ne.s32.totalorder %s160, %s174
      %p176 = scmp.eq.s32.totalorder %s24, 0
      %p177 = por %p175, %p176
      %s179 = sadd.s32 %s178, 1
      %p182 = scmp.eq.s32.totalorder %s18, 1
      %p183 = scmp.ne.s32.totalorder %s178, %s180
      %p184 = scmp.eq.s32.totalorder %s18, 0
      %p185 = por %p183, %p184
      %p186 = scmp.ne.s32.totalorder %s178, %s180
      %p187 = scmp.eq.s32.totalorder %s23, 1
      %p188 = por %p186, %p187
      %p189 = scmp.ne.s32.totalorder %s180, %s181
      %p190 = scmp.eq.s32.totalorder %s23, 0
      %p191 = por %p189, %p190
      %p192 = scmp.ne.s32.totalorder %s180, %s181
      %p193 = scmp.eq.s32.totalorder %s24, 1
      %p194 = por %p192, %p193
      %p196 = scmp.ne.s32.totalorder %s181, %s195
      %p197 = scmp.eq.s32.totalorder %s24, 0
      %p198 = por %p196, %p197
      %s200 = sadd.s32 %s199, 1
      %p203 = scmp.eq.s32.totalorder %s18, 1
      %p204 = scmp.ne.s32.totalorder %s199, %s201
      %p205 = scmp.eq.s32.totalorder %s18, 0
      %p206 = por %p204, %p205
      %p207 = scmp.ne.s32.totalorder %s199, %s201
      %p208 = scmp.eq.s32.totalorder %s23, 1
      %p209 = por %p207, %p208
      %p210 = scmp.ne.s32.totalorder %s201, %s202
      %p211 = scmp.eq.s32.totalorder %s23, 0
      %p212 = por %p210, %p211
      %p213 = scmp.ne.s32.totalorder %s201, %s202
      %p214 = scmp.eq.s32.totalorder %s24, 1
      %p215 = por %p213, %p214
      %p217 = scmp.ne.s32.totalorder %s202, %s216
      %p218 = scmp.eq.s32.totalorder %s24, 0
      %p219 = por %p217, %p218
      %s220 = ssub.s32 %s18, %s25
      %p221 = scmp.eq.s32.totalorder %s220, 0
      %s223 = sadd.s32 %s222, 1
      %s224 = scalar_select %p221, %s222, %s223
      %p227 = pneg %p221
      %p228 = scmp.eq.s32.totalorder %s18, 1
      %p229 = por %p227, %p228
      %p230 = scmp.ne.s32.totalorder %s222, %s225
      %p231 = scmp.eq.s32.totalorder %s18, 0
      %p232 = por %p230, %p231
      %p233 = scmp.ne.s32.totalorder %s222, %s225
      %p234 = scmp.eq.s32.totalorder %s23, 1
      %p235 = por %p233, %p234
      %p236 = scmp.ne.s32.totalorder %s225, %s226
      %p237 = scmp.eq.s32.totalorder %s23, 0
      %p238 = por %p236, %p237
      %p239 = scmp.ne.s32.totalorder %s225, %s226
      %p240 = scmp.eq.s32.totalorder %s24, 1
      %p241 = por %p239, %p240
      %p243 = scmp.ne.s32.totalorder %s226, %s242
      %p244 = scmp.eq.s32.totalorder %s24, 0
      %p245 = por %p243, %p244
      %p246 = scmp.le.s32.totalorder 1, %s18
      %p247 = scmp.lt.s32.totalorder %s18, 3
      %p248 = pnand %p246, %p247
      %p249 = pneg %p248
      // Predicated region
      $region9: #{tpu_custom_call.1} parent=5 // pred_check
        _
      $region10: #{tpu_custom_call.1} parent=5 // pred_check_branch
        %251 = sbr.rel (%p248) target = $region12
      $region11: #{tpu_custom_call.1} parent=5 // pred_region
        %s252 = ssub.s32 %s18, 1
        // Predicated region
        $region13: #{tpu_custom_call.1} parent=11 // pred_check
          %p253 = pneg %p65
        $region14: #{tpu_custom_call.1} parent=11 // pred_check_branch
          %255 = sbr.rel (%p253) target = $region16
        $region15: #{tpu_custom_call.1} parent=11 // pred_region
          _
        $region16: #{tpu_custom_call.1} parent=11 // pred_fallthru
          _
        // Predicated region
        $region17: #{tpu_custom_call.1} parent=11 // pred_check
          %p256 = pneg %p86
        $region18: #{tpu_custom_call.1} parent=11 // pred_check_branch
          %258 = sbr.rel (%p256) target = $region20
        $region19: #{tpu_custom_call.1} parent=11 // pred_region
          _
        $region20: #{tpu_custom_call.1} parent=11 // pred_fallthru
          _
        // Predicated region
        $region21: #{tpu_custom_call.1} parent=11 // pred_check
          %p259 = pneg %p107
        $region22: #{tpu_custom_call.1} parent=11 // pred_check_branch
          %261 = sbr.rel (%p259) target = $region24
        $region23: #{tpu_custom_call.1} parent=11 // pred_region
          _
        $region24: #{tpu_custom_call.1} parent=11 // pred_fallthru
          _
        // Predicated region
        $region25: #{tpu_custom_call.1} parent=11 // pred_check
          %p262 = pneg %p128
        $region26: #{tpu_custom_call.1} parent=11 // pred_check_branch
          %264 = sbr.rel (%p262) target = $region28
        $region27: #{tpu_custom_call.1} parent=11 // pred_region
          _
        $region28: #{tpu_custom_call.1} parent=11 // pred_fallthru
          _
        // Predicated region
        $region29: #{tpu_custom_call.1} parent=11 // pred_check
          %p265 = pneg %p149
        $region30: #{tpu_custom_call.1} parent=11 // pred_check_branch
          %267 = sbr.rel (%p265) target = $region32
        $region31: #{tpu_custom_call.1} parent=11 // pred_region
          _
        $region32: #{tpu_custom_call.1} parent=11 // pred_fallthru
          _
        // Predicated region
        $region33: #{tpu_custom_call.1} parent=11 // pred_check
          %p268 = pneg %p170
        $region34: #{tpu_custom_call.1} parent=11 // pred_check_branch
          %270 = sbr.rel (%p268) target = $region36
        $region35: #{tpu_custom_call.1} parent=11 // pred_region
          _
        $region36: #{tpu_custom_call.1} parent=11 // pred_fallthru
          _
        // Predicated region
        $region37: #{tpu_custom_call.1} parent=11 // pred_check
          %p271 = pneg %p191
        $region38: #{tpu_custom_call.1} parent=11 // pred_check_branch
          %273 = sbr.rel (%p271) target = $region40
        $region39: #{tpu_custom_call.1} parent=11 // pred_region
          _
        $region40: #{tpu_custom_call.1} parent=11 // pred_fallthru
          _
        // Predicated region
        $region41: #{tpu_custom_call.1} parent=11 // pred_check
          %p274 = pneg %p212
        $region42: #{tpu_custom_call.1} parent=11 // pred_check_branch
          %276 = sbr.rel (%p274) target = $region44
        $region43: #{tpu_custom_call.1} parent=11 // pred_region
          _
        $region44: #{tpu_custom_call.1} parent=11 // pred_fallthru
          _
      $region12: #{tpu_custom_call.1} parent=5 // pred_fallthru
        _
      %p277 = scmp.lt.s32.totalorder %s18, 2
      // Predicated region
      $region45: #{tpu_custom_call.1} parent=5 // pred_check
        %p278 = pneg %p277
      $region46: #{tpu_custom_call.1} parent=5 // pred_check_branch
        %280 = sbr.rel (%p278) target = $region48
      $region47: #{tpu_custom_call.1} parent=5 // pred_region
        // Predicated region
        $region49: #{tpu_custom_call.1} parent=47 // pred_check
          %p281 = pneg %p38
        $region50: #{tpu_custom_call.1} parent=47 // pred_check_branch
          %283 = sbr.rel (%p281) target = $region52
        $region51: #{tpu_custom_call.1} parent=47 // pred_region
          %s284 = smul.u32 16, %s18
          %p285 = scmp.lt.s32.totalorder %s284, 31
          %s286 = scalar_select %p285, %s284, 31
          %s287 = smul.addr %s286, 4
          %s288 = scalar_lea.vmem %s0, %s287
          %s289 = smul.u32 16, %s18
        $region52: #{tpu_custom_call.1} parent=47 // pred_fallthru
          _
      $region48: #{tpu_custom_call.1} parent=5 // pred_fallthru
        _
      %p290 = scmp.le.s32.totalorder 1, %s18
      %p291 = scmp.lt.s32.totalorder %s18, 3
      %p292 = pnand %p290, %p291
      %p293 = pneg %p292
      // Predicated region
      $region53: #{tpu_custom_call.1} parent=5 // pred_check
        _
      $region54: #{tpu_custom_call.1} parent=5 // pred_check_branch
        %295 = sbr.rel (%p292) target = $region56
      $region55: #{tpu_custom_call.1} parent=5 // pred_region
        %s296 = ssub.s32 %s18, 1
        %s297 = smul.u32 16, %s23
        %p298 = scmp.lt.s32.totalorder %s297, 31
        %s299 = scalar_select %p298, %s297, 31
        %s300 = smul.addr %s299, 4
        %s301 = scalar_lea.vmem %s0, %s300
        %p302 = pneg %p44
        %p303 = pneg %p41
        %p304 = pneg %p65
        %p305 = pneg %p62
        %p306 = pneg %p86
        %p307 = pneg %p83
        %p308 = pneg %p107
        %p309 = pneg %p104
        %p310 = pneg %p128
        %p311 = pneg %p125
        %p312 = pneg %p149
        %p313 = pneg %p146
        %p314 = pneg %p170
        %p315 = pneg %p167
        %p316 = pneg %p191
        %p317 = pneg %p188
        %p318 = pneg %p212
        %p319 = pneg %p209
        %p320 = pneg %p238
        %p321 = pneg %p235
        %s322 = sand.u32 %s225, 1
        %s323 = scalar_lea.sflag [#allocation3], %s322
        %s324 = sand.u32 %s225, 1
        %s325 = smul.addr %s324, 128
        %s326 = scalar_lea.vmem [#allocation2], %s325
        %s327 = smul.u32 16, %s23
        %p328 = scmp.lt.s32.totalorder %s327, 31
        %s329 = scalar_select %p328, %s327, 31
        %s330 = smul.addr %s329, 4
        %s331 = scalar_lea.vmem %s0, %s330
        %s332 = smul.u32 16, %s23
        %s333 = smul.u32 16, %s23
        %v335 = vld [vmem:[%s331] sm:$0xf]
        %v336 = vld [vmem:[%s331 + $0x4] sm:$0xf]
        %v337 = vld [vmem:[%s331 + $0x8] sm:$0xf]
        %v338 = vld [vmem:[%s331 + $0xc] sm:$0xf]
        %v339 = vld [vmem:[%s331 + $0x10] sm:$0xf]
        %v340 = vld [vmem:[%s331 + $0x14] sm:$0xf]
        %v341 = vld [vmem:[%s331 + $0x18] sm:$0xf]
        %v342 = vld [vmem:[%s331 + $0x1c] sm:$0xf]
        %v343 = vld [vmem:[%s331 + $0x20] sm:$0xf]
        %v344 = vld [vmem:[%s331 + $0x24] sm:$0xf]
        %v345 = vld [vmem:[%s331 + $0x28] sm:$0xf]
        %v346 = vld [vmem:[%s331 + $0x2c] sm:$0xf]
        %v347 = vld [vmem:[%s331 + $0x30] sm:$0xf]
        %v348 = vld [vmem:[%s331 + $0x34] sm:$0xf]
        %v349 = vld [vmem:[%s331 + $0x38] sm:$0xf]
        %v350 = vld [vmem:[%s331 + $0x3c] sm:$0xf]
        %v351 = vld [vmem:[%s1] sm:$0xf]
        %v352 = vld [vmem:[%s1 + $0x4] sm:$0xf]
        %v353 = vld [vmem:[%s2] sm:$0x1]
        %v355 = vlaneseq
        %v356 = vshrl.u32 %v355, 7
        %v357 = vsub.s32 0, %v356
        %v358 = vrot.slane %v353, %v357
        %v376 = vunpack.c.l.b16 %v335
        %v377 = vunpack.c.l.b16 %v336
        %v378 = vunpack.c.l.b16 %v337
        %v379 = vunpack.c.l.b16 %v338
        %v380 = vunpack.c.l.b16 %v339
        %v381 = vunpack.c.l.b16 %v340
        %v382 = vunpack.c.l.b16 %v341
        %v383 = vunpack.c.l.b16 %v342
        %v384 = vunpack.c.l.b16 %v343
        %v385 = vunpack.c.l.b16 %v344
        %v386 = vunpack.c.l.b16 %v345
        %v387 = vunpack.c.l.b16 %v346
        %v388 = vunpack.c.l.b16 %v347
        %v389 = vunpack.c.l.b16 %v348
        %v390 = vunpack.c.l.b16 %v349
        %v391 = vunpack.c.l.b16 %v350
        %v392 = vpack.c.b16 %v377, %v376
        %v393 = vpack.c.b16 %v379, %v378
        %v394 = vpack.c.b16 %v381, %v380
        %v395 = vpack.c.b16 %v383, %v382
        %v396 = vpack.c.b16 %v385, %v384
        %v397 = vpack.c.b16 %v387, %v386
        %v398 = vpack.c.b16 %v389, %v388
        %v399 = vpack.c.b16 %v391, %v390
        %v402 = vunpack.c.l.b16 %v351
        %v403 = vunpack.c.l.b16 %v352
        %v404 = vpack.c.b16 %v403, %v402
        %vm406 = vcmask 130048
        %v408 = vsel %vm406, %v392, 0
        %v411 = vsel %vm406, %v393, 0
        %v414 = vsel %vm406, %v394, 0
        %v417 = vsel %vm406, %v395, 0
        %v420 = vsel %vm406, %v396, 0
        %v423 = vsel %vm406, %v397, 0
        %v426 = vsel %vm406, %v398, 0
        %v429 = vsel %vm406, %v399, 0
        %431 = vmatprep.subr.bf16.mxu0 0
        %432 = vmatpush1.bf16.msra.mxu0 0
        %433 = vmatprep.subr.bf16.mxu0 0
        %434 = vmatpush1.bf16.msra.mxu0 0
        %435 = vmatprep.subr.bf16.mxu0 0
        %436 = vmatpush1.bf16.msra.mxu0 0
        %437 = vmatprep.subr.bf16.mxu0 0
        %438 = vmatpush1.bf16.msra.mxu0 0
        %439 = vmatprep.subr.bf16.mxu0 0
        %440 = vmatpush1.bf16.msra.mxu0 0
        %441 = vmatprep.subr.bf16.mxu0 0
        %442 = vmatpush1.bf16.msra.mxu0 0
        %443 = vmatprep.subr.bf16.mxu0 0
        %444 = vmatpush1.bf16.msra.mxu0 0
        %445 = vmatprep.subr.bf16.mxu0 0
        %446 = vmatpush1.bf16.msra.mxu0 %v404
        %447 = vmatprep.subr.bf16.mxu0 0
        %448 = vmatpush2.bf16.msra.mxu0 0
        %449 = vmatprep.subr.bf16.mxu0 0
        %450 = vmatpush2.bf16.msra.mxu0 0
        %451 = vmatprep.subr.bf16.mxu0 0
        %452 = vmatpush2.bf16.msra.mxu0 0
        %453 = vmatprep.subr.bf16.mxu0 0
        %454 = vmatpush2.bf16.msra.mxu0 0
        %455 = vmatprep.subr.bf16.mxu0 0
        %456 = vmatpush2.bf16.msra.mxu0 0
        %457 = vmatprep.subr.bf16.mxu0 0
        %458 = vmatpush2.bf16.msra.mxu0 0
        %459 = vmatprep.subr.bf16.mxu0 0
        %460 = vmatpush2.bf16.msra.mxu0 0
        %461 = vmatprep.subr.bf16.mxu0 0
        %462 = vmatpush2.bf16.msra.mxu0 0
        %463 = vmatprep.mubr.bf16.mxu0 0
        %464 = vmatmul.mubr.bf16.gmra.mxu0 %v408
        %v465 = vpop.f32.mrf.mxu0
        %v466 = vadd.f32 %v358, %v465
        %v467 = vpop.f32.mrf.mxu0
        %v468 = vpop.f32.mrf.mxu0
        %v469 = vadd.f32 %v358, %v468
        %v470 = vpop.f32.mrf.mxu0
        %471 = vmatprep.mubr.bf16.mxu0 0
        %472 = vmatmul.mubr.bf16.gmra.mxu0 %v411
        %v473 = vpop.f32.mrf.mxu0
        %v474 = vadd.f32 %v358, %v473
        %v475 = vpop.f32.mrf.mxu0
        %v476 = vpop.f32.mrf.mxu0
        %v477 = vadd.f32 %v358, %v476
        %v478 = vpop.f32.mrf.mxu0
        %479 = vmatprep.mubr.bf16.mxu0 0
        %480 = vmatmul.mubr.bf16.gmra.mxu0 %v414
        %v481 = vpop.f32.mrf.mxu0
        %v482 = vadd.f32 %v358, %v481
        %v483 = vpop.f32.mrf.mxu0
        %v484 = vpop.f32.mrf.mxu0
        %v485 = vadd.f32 %v358, %v484
        %v486 = vpop.f32.mrf.mxu0
        %487 = vmatprep.mubr.bf16.mxu0 0
        %488 = vmatmul.mubr.bf16.gmra.mxu0 %v417
        %v489 = vpop.f32.mrf.mxu0
        %v490 = vadd.f32 %v358, %v489
        %v491 = vpop.f32.mrf.mxu0
        %v492 = vpop.f32.mrf.mxu0
        %v493 = vadd.f32 %v358, %v492
        %v494 = vpop.f32.mrf.mxu0
        %495 = vmatprep.mubr.bf16.mxu0 0
        %496 = vmatmul.mubr.bf16.gmra.mxu0 %v420
        %v497 = vpop.f32.mrf.mxu0
        %v498 = vadd.f32 %v358, %v497
        %v499 = vpop.f32.mrf.mxu0
        %v500 = vpop.f32.mrf.mxu0
        %v501 = vadd.f32 %v358, %v500
        %v502 = vpop.f32.mrf.mxu0
        %503 = vmatprep.mubr.bf16.mxu0 0
        %504 = vmatmul.mubr.bf16.gmra.mxu0 %v423
        %v505 = vpop.f32.mrf.mxu0
        %v506 = vadd.f32 %v358, %v505
        %v507 = vpop.f32.mrf.mxu0
        %v508 = vpop.f32.mrf.mxu0
        %v509 = vadd.f32 %v358, %v508
        %v510 = vpop.f32.mrf.mxu0
        %511 = vmatprep.mubr.bf16.mxu0 0
        %512 = vmatmul.mubr.bf16.gmra.mxu0 %v426
        %v513 = vpop.f32.mrf.mxu0
        %v514 = vadd.f32 %v358, %v513
        %v515 = vpop.f32.mrf.mxu0
        %v516 = vpop.f32.mrf.mxu0
        %v517 = vadd.f32 %v358, %v516
        %v518 = vpop.f32.mrf.mxu0
        %519 = vmatprep.mubr.bf16.mxu0 0
        %520 = vmatmul.mubr.bf16.gmra.mxu0 %v429
        %v521 = vpop.f32.mrf.mxu0
        %v522 = vadd.f32 %v358, %v521
        %v523 = vpop.f32.mrf.mxu0
        %v524 = vpop.f32.mrf.mxu0
        %v525 = vadd.f32 %v358, %v524
        %v526 = vpop.f32.mrf.mxu0
        %527 = vdwg.mxu0
        %v528 = vmax.f32 %v466, 0.0
        %v529 = vmax.f32 %v469, 0.0
        %v530 = vmax.f32 %v474, 0.0
        %v531 = vmax.f32 %v477, 0.0
        %v532 = vmax.f32 %v482, 0.0
        %v533 = vmax.f32 %v485, 0.0
        %v534 = vmax.f32 %v490, 0.0
        %v535 = vmax.f32 %v493, 0.0
        %v536 = vmax.f32 %v498, 0.0
        %v537 = vmax.f32 %v501, 0.0
        %v538 = vmax.f32 %v506, 0.0
        %v539 = vmax.f32 %v509, 0.0
        %v540 = vmax.f32 %v514, 0.0
        %v541 = vmax.f32 %v517, 0.0
        %v542 = vmax.f32 %v522, 0.0
        %v543 = vmax.f32 %v525, 0.0
        %v544 = vpack.c.bf16 %v529, %v528
        %v545 = vpack.c.bf16 %v531, %v530
        %v546 = vpack.c.bf16 %v533, %v532
        %v547 = vpack.c.bf16 %v535, %v534
        %v548 = vpack.c.bf16 %v537, %v536
        %v549 = vpack.c.bf16 %v539, %v538
        %v550 = vpack.c.bf16 %v541, %v540
        %v551 = vpack.c.bf16 %v543, %v542
        %v552 = vld [vmem:[%s3] sm:$0xff]
        %v553 = vld [vmem:[%s3 + $0x8] sm:$0xff]
        %v554 = vld [vmem:[%s3 + $0x10] sm:$0xff]
        %v555 = vld [vmem:[%s3 + $0x18] sm:$0xff]
        %v556 = vld [vmem:[%s3 + $0x20] sm:$0xff]
        %v557 = vld [vmem:[%s3 + $0x28] sm:$0xff]
        %v558 = vld [vmem:[%s3 + $0x30] sm:$0xff]
        %v559 = vld [vmem:[%s3 + $0x38] sm:$0xff]
        %v560 = vld [vmem:[%s3 + $0x40] sm:$0xff]
        %v561 = vld [vmem:[%s3 + $0x48] sm:$0xff]
        %v562 = vld [vmem:[%s3 + $0x50] sm:$0xff]
        %v563 = vld [vmem:[%s3 + $0x58] sm:$0xff]
        %v564 = vld [vmem:[%s3 + $0x60] sm:$0xff]
        %v565 = vld [vmem:[%s3 + $0x68] sm:$0xff]
        %v566 = vld [vmem:[%s3 + $0x70] sm:$0xff]
        %v567 = vld [vmem:[%s3 + $0x78] sm:$0xff]
        %v568 = vld [vmem:[%s4] sm:$0x3]
        %v570 = vlaneseq
        %v571 = vshrl.u32 %v570, 7
        %v572 = vsub.s32 0, %v571
        %v573 = vrot.slane %v568, %v572
        %v574 = vlaneseq
        %v575 = vshrl.u32 %v574, 7
        %v576 = vsub.s32 1, %v575
        %v577 = vrot.slane %v568, %v576
        %v596 = vunpack.c.l.b16 %v552
        %v597 = vunpack.c.h.b16 %v552
        %v598 = vunpack.c.l.b16 %v553
        %v599 = vunpack.c.h.b16 %v553
        %v600 = vunpack.c.l.b16 %v554
        %v601 = vunpack.c.h.b16 %v554
        %v602 = vunpack.c.l.b16 %v555
        %v603 = vunpack.c.h.b16 %v555
        %v604 = vunpack.c.l.b16 %v556
        %v605 = vunpack.c.h.b16 %v556
        %v606 = vunpack.c.l.b16 %v557
        %v607 = vunpack.c.h.b16 %v557
        %v608 = vunpack.c.l.b16 %v558
        %v609 = vunpack.c.h.b16 %v558
        %v610 = vunpack.c.l.b16 %v559
        %v611 = vunpack.c.h.b16 %v559
        %v612 = vunpack.c.l.b16 %v560
        %v613 = vunpack.c.h.b16 %v560
        %v614 = vunpack.c.l.b16 %v561
        %v615 = vunpack.c.h.b16 %v561
        %v616 = vunpack.c.l.b16 %v562
        %v617 = vunpack.c.h.b16 %v562
        %v618 = vunpack.c.l.b16 %v563
        %v619 = vunpack.c.h.b16 %v563
        %v620 = vunpack.c.l.b16 %v564
        %v621 = vunpack.c.h.b16 %v564
        %v622 = vunpack.c.l.b16 %v565
        %v623 = vunpack.c.h.b16 %v565
        %v624 = vunpack.c.l.b16 %v566
        %v625 = vunpack.c.h.b16 %v566
        %v626 = vunpack.c.l.b16 %v567
        %v627 = vunpack.c.h.b16 %v567
        %v628 = vpack.c.b16 %v598, %v596
        %v629 = vpack.c.b16 %v599, %v597
        %v630 = vpack.c.b16 %v602, %v600
        %v631 = vpack.c.b16 %v603, %v601
        %v632 = vpack.c.b16 %v606, %v604
        %v633 = vpack.c.b16 %v607, %v605
        %v634 = vpack.c.b16 %v610, %v608
        %v635 = vpack.c.b16 %v611, %v609
        %v636 = vpack.c.b16 %v614, %v612
        %v637 = vpack.c.b16 %v615, %v613
        %v638 = vpack.c.b16 %v618, %v616
        %v639 = vpack.c.b16 %v619, %v617
        %v640 = vpack.c.b16 %v622, %v620
        %v641 = vpack.c.b16 %v623, %v621
        %v642 = vpack.c.b16 %v626, %v624
        %v643 = vpack.c.b16 %v627, %v625
        %660 = vmatprep.subr.bf16.mxu0 %v643
        %661 = vmatpush1.bf16.msra.mxu0 %v642
        %662 = vmatprep.subr.bf16.mxu0 %v641
        %663 = vmatpush1.bf16.msra.mxu0 %v640
        %664 = vmatprep.subr.bf16.mxu0 %v639
        %665 = vmatpush1.bf16.msra.mxu0 %v638
        %666 = vmatprep.subr.bf16.mxu0 %v637
        %667 = vmatpush1.bf16.msra.mxu0 %v636
        %668 = vmatprep.subr.bf16.mxu0 %v635
        %669 = vmatpush1.bf16.msra.mxu0 %v634
        %670 = vmatprep.subr.bf16.mxu0 %v633
        %671 = vmatpush1.bf16.msra.mxu0 %v632
        %672 = vmatprep.subr.bf16.mxu0 %v631
        %673 = vmatpush1.bf16.msra.mxu0 %v630
        %674 = vmatprep.subr.bf16.mxu0 %v629
        %675 = vmatpush1.bf16.msra.mxu0 %v628
        %676 = vmatprep.subr.bf16.mxu0 0
        %677 = vmatpush2.bf16.msra.mxu0 0
        %678 = vmatprep.subr.bf16.mxu0 0
        %679 = vmatpush2.bf16.msra.mxu0 0
        %680 = vmatprep.subr.bf16.mxu0 0
        %681 = vmatpush2.bf16.msra.mxu0 0
        %682 = vmatprep.subr.bf16.mxu0 0
        %683 = vmatpush2.bf16.msra.mxu0 0
        %684 = vmatprep.subr.bf16.mxu0 0
        %685 = vmatpush2.bf16.msra.mxu0 0
        %686 = vmatprep.subr.bf16.mxu0 0
        %687 = vmatpush2.bf16.msra.mxu0 0
        %688 = vmatprep.subr.bf16.mxu0 0
        %689 = vmatpush2.bf16.msra.mxu0 0
        %690 = vmatprep.subr.bf16.mxu0 0
        %691 = vmatpush2.bf16.msra.mxu0 0
        %692 = vmatprep.mubr.bf16.mxu0 0
        %693 = vmatmul.mubr.bf16.gmra.mxu0 %v544
        %v694 = vpop.f32.mrf.mxu0
        %v695 = vadd.f32 %v573, %v694
        %v696 = vpop.f32.mrf.mxu0
        %v697 = vadd.f32 %v577, %v696
        %v698 = vpop.f32.mrf.mxu0
        %v699 = vadd.f32 %v573, %v698
        %v700 = vpop.f32.mrf.mxu0
        %v701 = vadd.f32 %v577, %v700
        %702 = vmatprep.mubr.bf16.mxu0 0
        %703 = vmatmul.mubr.bf16.gmra.mxu0 %v545
        %v704 = vpop.f32.mrf.mxu0
        %v705 = vadd.f32 %v573, %v704
        %v706 = vpop.f32.mrf.mxu0
        %v707 = vadd.f32 %v577, %v706
        %v708 = vpop.f32.mrf.mxu0
        %v709 = vadd.f32 %v573, %v708
        %v710 = vpop.f32.mrf.mxu0
        %v711 = vadd.f32 %v577, %v710
        %712 = vmatprep.mubr.bf16.mxu0 0
        %713 = vmatmul.mubr.bf16.gmra.mxu0 %v546
        %v714 = vpop.f32.mrf.mxu0
        %v715 = vadd.f32 %v573, %v714
        %v716 = vpop.f32.mrf.mxu0
        %v717 = vadd.f32 %v577, %v716
        %v718 = vpop.f32.mrf.mxu0
        %v719 = vadd.f32 %v573, %v718
        %v720 = vpop.f32.mrf.mxu0
        %v721 = vadd.f32 %v577, %v720
        %722 = vmatprep.mubr.bf16.mxu0 0
        %723 = vmatmul.mubr.bf16.gmra.mxu0 %v547
        %v724 = vpop.f32.mrf.mxu0
        %v725 = vadd.f32 %v573, %v724
        %v726 = vpop.f32.mrf.mxu0
        %v727 = vadd.f32 %v577, %v726
        %v728 = vpop.f32.mrf.mxu0
        %v729 = vadd.f32 %v573, %v728
        %v730 = vpop.f32.mrf.mxu0
        %v731 = vadd.f32 %v577, %v730
        %732 = vmatprep.mubr.bf16.mxu0 0
        %733 = vmatmul.mubr.bf16.gmra.mxu0 %v548
        %v734 = vpop.f32.mrf.mxu0
        %v735 = vadd.f32 %v573, %v734
        %v736 = vpop.f32.mrf.mxu0
        %v737 = vadd.f32 %v577, %v736
        %v738 = vpop.f32.mrf.mxu0
        %v739 = vadd.f32 %v573, %v738
        %v740 = vpop.f32.mrf.mxu0
        %v741 = vadd.f32 %v577, %v740
        %742 = vmatprep.mubr.bf16.mxu0 0
        %743 = vmatmul.mubr.bf16.gmra.mxu0 %v549
        %v744 = vpop.f32.mrf.mxu0
        %v745 = vadd.f32 %v573, %v744
        %v746 = vpop.f32.mrf.mxu0
        %v747 = vadd.f32 %v577, %v746
        %v748 = vpop.f32.mrf.mxu0
        %v749 = vadd.f32 %v573, %v748
        %v750 = vpop.f32.mrf.mxu0
        %v751 = vadd.f32 %v577, %v750
        %752 = vmatprep.mubr.bf16.mxu0 0
        %753 = vmatmul.mubr.bf16.gmra.mxu0 %v550
        %v754 = vpop.f32.mrf.mxu0
        %v755 = vadd.f32 %v573, %v754
        %v756 = vpop.f32.mrf.mxu0
        %v757 = vadd.f32 %v577, %v756
        %v758 = vpop.f32.mrf.mxu0
        %v759 = vadd.f32 %v573, %v758
        %v760 = vpop.f32.mrf.mxu0
        %v761 = vadd.f32 %v577, %v760
        %762 = vmatprep.mubr.bf16.mxu0 0
        %763 = vmatmul.mubr.bf16.gmra.mxu0 %v551
        %v764 = vpop.f32.mrf.mxu0
        %v765 = vadd.f32 %v573, %v764
        %v766 = vpop.f32.mrf.mxu0
        %v767 = vadd.f32 %v577, %v766
        %v768 = vpop.f32.mrf.mxu0
        %v769 = vadd.f32 %v573, %v768
        %v770 = vpop.f32.mrf.mxu0
        %v771 = vadd.f32 %v577, %v770
        %772 = vdwg.mxu0
        %v773 = vmax.f32 %v695, 0.0
        %v774 = vmax.f32 %v697, 0.0
        %v775 = vmax.f32 %v699, 0.0
        %v776 = vmax.f32 %v701, 0.0
        %v777 = vmax.f32 %v705, 0.0
        %v778 = vmax.f32 %v707, 0.0
        %v779 = vmax.f32 %v709, 0.0
        %v780 = vmax.f32 %v711, 0.0
        %v781 = vmax.f32 %v715, 0.0
        %v782 = vmax.f32 %v717, 0.0
        %v783 = vmax.f32 %v719, 0.0
        %v784 = vmax.f32 %v721, 0.0
        %v785 = vmax.f32 %v725, 0.0
        %v786 = vmax.f32 %v727, 0.0
        %v787 = vmax.f32 %v729, 0.0
        %v788 = vmax.f32 %v731, 0.0
        %v789 = vmax.f32 %v735, 0.0
        %v790 = vmax.f32 %v737, 0.0
        %v791 = vmax.f32 %v739, 0.0
        %v792 = vmax.f32 %v741, 0.0
        %v793 = vmax.f32 %v745, 0.0
        %v794 = vmax.f32 %v747, 0.0
        %v795 = vmax.f32 %v749, 0.0
        %v796 = vmax.f32 %v751, 0.0
        %v797 = vmax.f32 %v755, 0.0
        %v798 = vmax.f32 %v757, 0.0
        %v799 = vmax.f32 %v759, 0.0
        %v800 = vmax.f32 %v761, 0.0
        %v801 = vmax.f32 %v765, 0.0
        %v802 = vmax.f32 %v767, 0.0
        %v803 = vmax.f32 %v769, 0.0
        %v804 = vmax.f32 %v771, 0.0
        %v805 = vpack.c.bf16 %v775, %v773
        %v806 = vpack.c.bf16 %v776, %v774
        %v807 = vpack.c.bf16 %v779, %v777
        %v808 = vpack.c.bf16 %v780, %v778
        %v809 = vpack.c.bf16 %v783, %v781
        %v810 = vpack.c.bf16 %v784, %v782
        %v811 = vpack.c.bf16 %v787, %v785
        %v812 = vpack.c.bf16 %v788, %v786
        %v813 = vpack.c.bf16 %v791, %v789
        %v814 = vpack.c.bf16 %v792, %v790
        %v815 = vpack.c.bf16 %v795, %v793
        %v816 = vpack.c.bf16 %v796, %v794
        %v817 = vpack.c.bf16 %v799, %v797
        %v818 = vpack.c.bf16 %v800, %v798
        %v819 = vpack.c.bf16 %v803, %v801
        %v820 = vpack.c.bf16 %v804, %v802
        %v821 = vld [vmem:[%s5] sm:$0xf]
        %v822 = vld [vmem:[%s5 + $0x4] sm:$0xf]
        %v823 = vld [vmem:[%s5 + $0x8] sm:$0xf]
        %v824 = vld [vmem:[%s5 + $0xc] sm:$0xf]
        %v825 = vld [vmem:[%s5 + $0x10] sm:$0xf]
        %v826 = vld [vmem:[%s5 + $0x14] sm:$0xf]
        %v827 = vld [vmem:[%s5 + $0x18] sm:$0xf]
        %v828 = vld [vmem:[%s5 + $0x1c] sm:$0xf]
        %v829 = vld [vmem:[%s5 + $0x20] sm:$0xf]
        %v830 = vld [vmem:[%s5 + $0x24] sm:$0xf]
        %v831 = vld [vmem:[%s5 + $0x28] sm:$0xf]
        %v832 = vld [vmem:[%s5 + $0x2c] sm:$0xf]
        %v833 = vld [vmem:[%s5 + $0x30] sm:$0xf]
        %v834 = vld [vmem:[%s5 + $0x34] sm:$0xf]
        %v835 = vld [vmem:[%s5 + $0x38] sm:$0xf]
        %v836 = vld [vmem:[%s5 + $0x3c] sm:$0xf]
        %v837 = vld [vmem:[%s5 + $0x40] sm:$0xf]
        %v838 = vld [vmem:[%s5 + $0x44] sm:$0xf]
        %v839 = vld [vmem:[%s5 + $0x48] sm:$0xf]
        %v840 = vld [vmem:[%s5 + $0x4c] sm:$0xf]
        %v841 = vld [vmem:[%s5 + $0x50] sm:$0xf]
        %v842 = vld [vmem:[%s5 + $0x54] sm:$0xf]
        %v843 = vld [vmem:[%s5 + $0x58] sm:$0xf]
        %v844 = vld [vmem:[%s5 + $0x5c] sm:$0xf]
        %v845 = vld [vmem:[%s5 + $0x60] sm:$0xf]
        %v846 = vld [vmem:[%s5 + $0x64] sm:$0xf]
        %v847 = vld [vmem:[%s5 + $0x68] sm:$0xf]
        %v848 = vld [vmem:[%s5 + $0x6c] sm:$0xf]
        %v849 = vld [vmem:[%s5 + $0x70] sm:$0xf]
        %v850 = vld [vmem:[%s5 + $0x74] sm:$0xf]
        %v851 = vld [vmem:[%s5 + $0x78] sm:$0xf]
        %v852 = vld [vmem:[%s5 + $0x7c] sm:$0xf]
        %v853 = vld [vmem:[%s6] sm:$0x1]
        %v855 = vlaneseq
        %v856 = vshrl.u32 %v855, 7
        %v857 = vsub.s32 0, %v856
        %v858 = vrot.slane %v853, %v857
        %v892 = vunpack.c.l.b16 %v821
        %v893 = vunpack.c.l.b16 %v822
        %v894 = vunpack.c.l.b16 %v823
        %v895 = vunpack.c.l.b16 %v824
        %v896 = vunpack.c.l.b16 %v825
        %v897 = vunpack.c.l.b16 %v826
        %v898 = vunpack.c.l.b16 %v827
        %v899 = vunpack.c.l.b16 %v828
        %v900 = vunpack.c.l.b16 %v829
        %v901 = vunpack.c.l.b16 %v830
        %v902 = vunpack.c.l.b16 %v831
        %v903 = vunpack.c.l.b16 %v832
        %v904 = vunpack.c.l.b16 %v833
        %v905 = vunpack.c.l.b16 %v834
        %v906 = vunpack.c.l.b16 %v835
        %v907 = vunpack.c.l.b16 %v836
        %v908 = vunpack.c.l.b16 %v837
        %v909 = vunpack.c.l.b16 %v838
        %v910 = vunpack.c.l.b16 %v839
        %v911 = vunpack.c.l.b16 %v840
        %v912 = vunpack.c.l.b16 %v841
        %v913 = vunpack.c.l.b16 %v842
        %v914 = vunpack.c.l.b16 %v843
        %v915 = vunpack.c.l.b16 %v844
        %v916 = vunpack.c.l.b16 %v845
        %v917 = vunpack.c.l.b16 %v846
        %v918 = vunpack.c.l.b16 %v847
        %v919 = vunpack.c.l.b16 %v848
        %v920 = vunpack.c.l.b16 %v849
        %v921 = vunpack.c.l.b16 %v850
        %v922 = vunpack.c.l.b16 %v851
        %v923 = vunpack.c.l.b16 %v852
        %v924 = vpack.c.b16 %v893, %v892
        %v925 = vpack.c.b16 %v895, %v894
        %v926 = vpack.c.b16 %v897, %v896
        %v927 = vpack.c.b16 %v899, %v898
        %v928 = vpack.c.b16 %v901, %v900
        %v929 = vpack.c.b16 %v903, %v902
        %v930 = vpack.c.b16 %v905, %v904
        %v931 = vpack.c.b16 %v907, %v906
        %v932 = vpack.c.b16 %v909, %v908
        %v933 = vpack.c.b16 %v911, %v910
        %v934 = vpack.c.b16 %v913, %v912
        %v935 = vpack.c.b16 %v915, %v914
        %v936 = vpack.c.b16 %v917, %v916
        %v937 = vpack.c.b16 %v919, %v918
        %v938 = vpack.c.b16 %v921, %v920
        %v939 = vpack.c.b16 %v923, %v922
        %956 = vmatprep.subr.bf16.mxu0 0
        %957 = vmatpush1.bf16.msra.mxu0 %v931
        %958 = vmatprep.subr.bf16.mxu0 0
        %959 = vmatpush1.bf16.msra.mxu0 %v930
        %960 = vmatprep.subr.bf16.mxu0 0
        %961 = vmatpush1.bf16.msra.mxu0 %v929
        %962 = vmatprep.subr.bf16.mxu0 0
        %963 = vmatpush1.bf16.msra.mxu0 %v928
        %964 = vmatprep.subr.bf16.mxu0 0
        %965 = vmatpush1.bf16.msra.mxu0 %v927
        %966 = vmatprep.subr.bf16.mxu0 0
        %967 = vmatpush1.bf16.msra.mxu0 %v926
        %968 = vmatprep.subr.bf16.mxu0 0
        %969 = vmatpush1.bf16.msra.mxu0 %v925
        %970 = vmatprep.subr.bf16.mxu0 0
        %971 = vmatpush1.bf16.msra.mxu0 %v924
        %972 = vmatprep.subr.bf16.mxu0 0
        %973 = vmatpush2.bf16.msra.mxu0 %v939
        %974 = vmatprep.subr.bf16.mxu0 0
        %975 = vmatpush2.bf16.msra.mxu0 %v938
        %976 = vmatprep.subr.bf16.mxu0 0
        %977 = vmatpush2.bf16.msra.mxu0 %v937
        %978 = vmatprep.subr.bf16.mxu0 0
        %979 = vmatpush2.bf16.msra.mxu0 %v936
        %980 = vmatprep.subr.bf16.mxu0 0
        %981 = vmatpush2.bf16.msra.mxu0 %v935
        %982 = vmatprep.subr.bf16.mxu0 0
        %983 = vmatpush2.bf16.msra.mxu0 %v934
        %984 = vmatprep.subr.bf16.mxu0 0
        %985 = vmatpush2.bf16.msra.mxu0 %v933
        %986 = vmatprep.subr.bf16.mxu0 0
        %987 = vmatpush2.bf16.msra.mxu0 %v932
        %988 = vmatprep.mubr.bf16.mxu0 %v806
        %989 = vmatmul.mubr.bf16.gmra.mxu0 %v805
        %v990 = vpop.f32.mrf.mxu0
        %v991 = vadd.f32 %v858, %v990
        %v992 = vpop.f32.mrf.mxu0
        %v993 = vpop.f32.mrf.mxu0
        %v994 = vadd.f32 %v858, %v993
        %v995 = vpop.f32.mrf.mxu0
        %996 = vmatprep.mubr.bf16.mxu0 %v808
        %997 = vmatmul.mubr.bf16.gmra.mxu0 %v807
        %v998 = vpop.f32.mrf.mxu0
        %v999 = vadd.f32 %v858, %v998
        %v1000 = vpop.f32.mrf.mxu0
        %v1001 = vpop.f32.mrf.mxu0
        %v1002 = vadd.f32 %v858, %v1001
        %v1003 = vpop.f32.mrf.mxu0
        %1004 = vmatprep.mubr.bf16.mxu0 %v810
        %1005 = vmatmul.mubr.bf16.gmra.mxu0 %v809
        %v1006 = vpop.f32.mrf.mxu0
        %v1007 = vadd.f32 %v858, %v1006
        %v1008 = vpop.f32.mrf.mxu0
        %v1009 = vpop.f32.mrf.mxu0
        %v1010 = vadd.f32 %v858, %v1009
        %v1011 = vpop.f32.mrf.mxu0
        %1012 = vmatprep.mubr.bf16.mxu0 %v812
        %1013 = vmatmul.mubr.bf16.gmra.mxu0 %v811
        %v1014 = vpop.f32.mrf.mxu0
        %v1015 = vadd.f32 %v858, %v1014
        %v1016 = vpop.f32.mrf.mxu0
        %v1017 = vpop.f32.mrf.mxu0
        %v1018 = vadd.f32 %v858, %v1017
        %v1019 = vpop.f32.mrf.mxu0
        %1020 = vmatprep.mubr.bf16.mxu0 %v814
        %1021 = vmatmul.mubr.bf16.gmra.mxu0 %v813
        %v1022 = vpop.f32.mrf.mxu0
        %v1023 = vadd.f32 %v858, %v1022
        %v1024 = vpop.f32.mrf.mxu0
        %v1025 = vpop.f32.mrf.mxu0
        %v1026 = vadd.f32 %v858, %v1025
        %v1027 = vpop.f32.mrf.mxu0
        %1028 = vmatprep.mubr.bf16.mxu0 %v816
        %1029 = vmatmul.mubr.bf16.gmra.mxu0 %v815
        %v1030 = vpop.f32.mrf.mxu0
        %v1031 = vadd.f32 %v858, %v1030
        %v1032 = vpop.f32.mrf.mxu0
        %v1033 = vpop.f32.mrf.mxu0
        %v1034 = vadd.f32 %v858, %v1033
        %v1035 = vpop.f32.mrf.mxu0
        %1036 = vmatprep.mubr.bf16.mxu0 %v818
        %1037 = vmatmul.mubr.bf16.gmra.mxu0 %v817
        %v1038 = vpop.f32.mrf.mxu0
        %v1039 = vadd.f32 %v858, %v1038
        %v1040 = vpop.f32.mrf.mxu0
        %v1041 = vpop.f32.mrf.mxu0
        %v1042 = vadd.f32 %v858, %v1041
        %v1043 = vpop.f32.mrf.mxu0
        %1044 = vmatprep.mubr.bf16.mxu0 %v820
        %1045 = vmatmul.mubr.bf16.gmra.mxu0 %v819
        %v1046 = vpop.f32.mrf.mxu0
        %v1047 = vadd.f32 %v858, %v1046
        %v1048 = vpop.f32.mrf.mxu0
        %v1049 = vpop.f32.mrf.mxu0
        %v1050 = vadd.f32 %v858, %v1049
        %v1051 = vpop.f32.mrf.mxu0
        %1052 = vdwg.mxu0
        %vm1053 = vcmask 261120
        %v1054 = vsel %vm1053, %v991, -inf
        %1055 = vmax.xlane.f32.xlu0 %v1054
        %v1056 = vpop.xlane.xlu0 %1055
        %v1057 = vsel %vm1053, %v994, -inf
        %1058 = vmax.xlane.f32.xlu0 %v1057
        %v1059 = vpop.xlane.xlu0 %1058
        %v1060 = vsel %vm1053, %v999, -inf
        %1061 = vmax.xlane.f32.xlu0 %v1060
        %v1062 = vpop.xlane.xlu0 %1061
        %v1063 = vsel %vm1053, %v1002, -inf
        %1064 = vmax.xlane.f32.xlu0 %v1063
        %v1065 = vpop.xlane.xlu0 %1064
        %v1066 = vsel %vm1053, %v1007, -inf
        %1067 = vmax.xlane.f32.xlu0 %v1066
        %v1068 = vpop.xlane.xlu0 %1067
        %v1069 = vsel %vm1053, %v1010, -inf
        %1070 = vmax.xlane.f32.xlu0 %v1069
        %v1071 = vpop.xlane.xlu0 %1070
        %v1072 = vsel %vm1053, %v1015, -inf
        %1073 = vmax.xlane.f32.xlu0 %v1072
        %v1074 = vpop.xlane.xlu0 %1073
        %v1075 = vsel %vm1053, %v1018, -inf
        %1076 = vmax.xlane.f32.xlu0 %v1075
        %v1077 = vpop.xlane.xlu0 %1076
        %v1078 = vsel %vm1053, %v1023, -inf
        %1079 = vmax.xlane.f32.xlu0 %v1078
        %v1080 = vpop.xlane.xlu0 %1079
        %v1081 = vsel %vm1053, %v1026, -inf
        %1082 = vmax.xlane.f32.xlu0 %v1081
        %v1083 = vpop.xlane.xlu0 %1082
        %v1084 = vsel %vm1053, %v1031, -inf
        %1085 = vmax.xlane.f32.xlu0 %v1084
        %v1086 = vpop.xlane.xlu0 %1085
        %v1087 = vsel %vm1053, %v1034, -inf
        %1088 = vmax.xlane.f32.xlu0 %v1087
        %v1089 = vpop.xlane.xlu0 %1088
        %v1090 = vsel %vm1053, %v1039, -inf
        %1091 = vmax.xlane.f32.xlu0 %v1090
        %v1092 = vpop.xlane.xlu0 %1091
        %v1093 = vsel %vm1053, %v1042, -inf
        %1094 = vmax.xlane.f32.xlu0 %v1093
        %v1095 = vpop.xlane.xlu0 %1094
        %v1096 = vsel %vm1053, %v1047, -inf
        %1097 = vmax.xlane.f32.xlu0 %v1096
        %v1098 = vpop.xlane.xlu0 %1097
        %v1099 = vsel %vm1053, %v1050, -inf
        %1100 = vmax.xlane.f32.xlu0 %v1099
        %v1101 = vpop.xlane.xlu0 %1100
        %v1102 = vsub.f32 %v991, %v1056
        %v1103 = vsub.f32 %v994, %v1059
        %v1104 = vsub.f32 %v999, %v1062
        %v1105 = vsub.f32 %v1002, %v1065
        %v1106 = vsub.f32 %v1007, %v1068
        %v1107 = vsub.f32 %v1010, %v1071
        %v1108 = vsub.f32 %v1015, %v1074
        %v1109 = vsub.f32 %v1018, %v1077
        %v1110 = vsub.f32 %v1023, %v1080
        %v1111 = vsub.f32 %v1026, %v1083
        %v1112 = vsub.f32 %v1031, %v1086
        %v1113 = vsub.f32 %v1034, %v1089
        %v1114 = vsub.f32 %v1039, %v1092
        %v1115 = vsub.f32 %v1042, %v1095
        %v1116 = vsub.f32 %v1047, %v1098
        %v1117 = vsub.f32 %v1050, %v1101
        %v1118 = vmul.f32 %v1102, 1.442695
        %v1119 = vpow.pop %v1118
        %v1120 = vmul.f32 %v1103, 1.442695
        %v1121 = vpow.pop %v1120
        %v1122 = vmul.f32 %v1104, 1.442695
        %v1123 = vpow.pop %v1122
        %v1124 = vmul.f32 %v1105, 1.442695
        %v1125 = vpow.pop %v1124
        %v1126 = vmul.f32 %v1106, 1.442695
        %v1127 = vpow.pop %v1126
        %v1128 = vmul.f32 %v1107, 1.442695
        %v1129 = vpow.pop %v1128
        %v1130 = vmul.f32 %v1108, 1.442695
        %v1131 = vpow.pop %v1130
        %v1132 = vmul.f32 %v1109, 1.442695
        %v1133 = vpow.pop %v1132
        %v1134 = vmul.f32 %v1110, 1.442695
        %v1135 = vpow.pop %v1134
        %v1136 = vmul.f32 %v1111, 1.442695
        %v1137 = vpow.pop %v1136
        %v1138 = vmul.f32 %v1112, 1.442695
        %v1139 = vpow.pop %v1138
        %v1140 = vmul.f32 %v1113, 1.442695
        %v1141 = vpow.pop %v1140
        %v1142 = vmul.f32 %v1114, 1.442695
        %v1143 = vpow.pop %v1142
        %v1144 = vmul.f32 %v1115, 1.442695
        %v1145 = vpow.pop %v1144
        %v1146 = vmul.f32 %v1116, 1.442695
        %v1147 = vpow.pop %v1146
        %v1148 = vmul.f32 %v1117, 1.442695
        %v1149 = vpow.pop %v1148
        %v1150 = vld [vmem:[%s7] sm:$0xff]
        %v1151 = vld [vmem:[%s7 + $0x8] sm:$0xff]
        %v1152 = vld [vmem:[%s7 + $0x10] sm:$0xff]
        %v1153 = vld [vmem:[%s7 + $0x18] sm:$0xff]
        %v1155 = vsel %vm1053, %v1119, 0
        %v1158 = vsel %vm1053, %v1121, 0
        %v1161 = vsel %vm1053, %v1123, 0
        %v1164 = vsel %vm1053, %v1125, 0
        %v1167 = vsel %vm1053, %v1127, 0
        %v1170 = vsel %vm1053, %v1129, 0
        %v1173 = vsel %vm1053, %v1131, 0
        %v1176 = vsel %vm1053, %v1133, 0
        %v1179 = vsel %vm1053, %v1135, 0
        %v1182 = vsel %vm1053, %v1137, 0
        %v1185 = vsel %vm1053, %v1139, 0
        %v1188 = vsel %vm1053, %v1141, 0
        %v1191 = vsel %vm1053, %v1143, 0
        %v1194 = vsel %vm1053, %v1145, 0
        %v1197 = vsel %vm1053, %v1147, 0
        %v1200 = vsel %vm1053, %v1149, 0
        %1202 = vmatprep.subr.mxu0 0.0
        %1203 = vmatpush1.msra.mxu0 0.0
        %1204 = vmatprep.subr.mxu0 0.0
        %1205 = vmatpush1.msra.mxu0 0.0
        %1206 = vmatprep.subr.mxu0 0.0
        %1207 = vmatpush1.msra.mxu0 0.0
        %1208 = vmatprep.subr.mxu0 0.0
        %1209 = vmatpush1.msra.mxu0 0.0
        %1210 = vmatprep.subr.mxu0 0.0
        %1211 = vmatpush1.msra.mxu0 0.0
        %1212 = vmatprep.subr.mxu0 0.0
        %1213 = vmatpush1.msra.mxu0 0.0
        %1214 = vmatprep.subr.mxu0 0.0
        %1215 = vmatpush1.msra.mxu0 0.0
        %1216 = vmatprep.subr.mxu0 0.0
        %1217 = vmatpush1.msra.mxu0 0.0
        %1218 = vmatprep.subr.mxu0 0.0
        %1219 = vmatpush1.msra.mxu0 0.0
        %1220 = vmatprep.subr.mxu0 0.0
        %1221 = vmatpush1.msra.mxu0 0.0
        %1222 = vmatprep.subr.mxu0 0.0
        %1223 = vmatpush1.msra.mxu0 0.0
        %1224 = vmatprep.subr.mxu0 0.0
        %1225 = vmatpush1.msra.mxu0 0.0
        %1226 = vmatprep.subr.mxu0 0.0
        %1227 = vmatpush1.msra.mxu0 %v1153
        %1228 = vmatprep.subr.mxu0 0.0
        %1229 = vmatpush1.msra.mxu0 %v1152
        %1230 = vmatprep.subr.mxu0 0.0
        %1231 = vmatpush1.msra.mxu0 %v1151
        %1232 = vmatprep.subr.mxu0 0.0
        %1233 = vmatpush1.msra.mxu0 %v1150
        %1234 = vmatprep.subr.mxu0 0.0
        %1235 = vmatpush2.msra.mxu0 0.0
        %1236 = vmatprep.subr.mxu0 0.0
        %1237 = vmatpush2.msra.mxu0 0.0
        %1238 = vmatprep.subr.mxu0 0.0
        %1239 = vmatpush2.msra.mxu0 0.0
        %1240 = vmatprep.subr.mxu0 0.0
        %1241 = vmatpush2.msra.mxu0 0.0
        %1242 = vmatprep.subr.mxu0 0.0
        %1243 = vmatpush2.msra.mxu0 0.0
        %1244 = vmatprep.subr.mxu0 0.0
        %1245 = vmatpush2.msra.mxu0 0.0
        %1246 = vmatprep.subr.mxu0 0.0
        %1247 = vmatpush2.msra.mxu0 0.0
        %1248 = vmatprep.subr.mxu0 0.0
        %1249 = vmatpush2.msra.mxu0 0.0
        %1250 = vmatprep.subr.mxu0 0.0
        %1251 = vmatpush2.msra.mxu0 0.0
        %1252 = vmatprep.subr.mxu0 0.0
        %1253 = vmatpush2.msra.mxu0 0.0
        %1254 = vmatprep.subr.mxu0 0.0
        %1255 = vmatpush2.msra.mxu0 0.0
        %1256 = vmatprep.subr.mxu0 0.0
        %1257 = vmatpush2.msra.mxu0 0.0
        %1258 = vmatprep.subr.mxu0 0.0
        %1259 = vmatpush2.msra.mxu0 0.0
        %1260 = vmatprep.subr.mxu0 0.0
        %1261 = vmatpush2.msra.mxu0 0.0
        %1262 = vmatprep.subr.mxu0 0.0
        %1263 = vmatpush2.msra.mxu0 0.0
        %1264 = vmatprep.subr.mxu0 0.0
        %1265 = vmatpush2.msra.mxu0 0.0
        %1266 = vmatprep.mubr.f32.mxu0 0.0
        %1267 = vmatmul.mubr.f32.gmra.mxu0 %v1155
        %v1268 = vpop.f32.mrf.mxu0
        %v1269 = vadd.f32 0.0, %v1268
        %v1270 = vpop.f32.mrf.mxu0
        %1271 = vmatprep.mubr.f32.mxu0 0.0
        %1272 = vmatmul.mubr.f32.gmra.mxu0 %v1158
        %v1273 = vpop.f32.mrf.mxu0
        %v1274 = vadd.f32 0.0, %v1273
        %v1275 = vpop.f32.mrf.mxu0
        %1276 = vmatprep.mubr.f32.mxu0 0.0
        %1277 = vmatmul.mubr.f32.gmra.mxu0 %v1161
        %v1278 = vpop.f32.mrf.mxu0
        %v1279 = vadd.f32 0.0, %v1278
        %v1280 = vpop.f32.mrf.mxu0
        %1281 = vmatprep.mubr.f32.mxu0 0.0
        %1282 = vmatmul.mubr.f32.gmra.mxu0 %v1164
        %v1283 = vpop.f32.mrf.mxu0
        %v1284 = vadd.f32 0.0, %v1283
        %v1285 = vpop.f32.mrf.mxu0
        %1286 = vmatprep.mubr.f32.mxu0 0.0
        %1287 = vmatmul.mubr.f32.gmra.mxu0 %v1167
        %v1288 = vpop.f32.mrf.mxu0
        %v1289 = vadd.f32 0.0, %v1288
        %v1290 = vpop.f32.mrf.mxu0
        %1291 = vmatprep.mubr.f32.mxu0 0.0
        %1292 = vmatmul.mubr.f32.gmra.mxu0 %v1170
        %v1293 = vpop.f32.mrf.mxu0
        %v1294 = vadd.f32 0.0, %v1293
        %v1295 = vpop.f32.mrf.mxu0
        %1296 = vmatprep.mubr.f32.mxu0 0.0
        %1297 = vmatmul.mubr.f32.gmra.mxu0 %v1173
        %v1298 = vpop.f32.mrf.mxu0
        %v1299 = vadd.f32 0.0, %v1298
        %v1300 = vpop.f32.mrf.mxu0
        %1301 = vmatprep.mubr.f32.mxu0 0.0
        %1302 = vmatmul.mubr.f32.gmra.mxu0 %v1176
        %v1303 = vpop.f32.mrf.mxu0
        %v1304 = vadd.f32 0.0, %v1303
        %v1305 = vpop.f32.mrf.mxu0
        %1306 = vmatprep.mubr.f32.mxu0 0.0
        %1307 = vmatmul.mubr.f32.gmra.mxu0 %v1179
        %v1308 = vpop.f32.mrf.mxu0
        %v1309 = vadd.f32 0.0, %v1308
        %v1310 = vpop.f32.mrf.mxu0
        %1311 = vmatprep.mubr.f32.mxu0 0.0
        %1312 = vmatmul.mubr.f32.gmra.mxu0 %v1182
        %v1313 = vpop.f32.mrf.mxu0
        %v1314 = vadd.f32 0.0, %v1313
        %v1315 = vpop.f32.mrf.mxu0
        %1316 = vmatprep.mubr.f32.mxu0 0.0
        %1317 = vmatmul.mubr.f32.gmra.mxu0 %v1185
        %v1318 = vpop.f32.mrf.mxu0
        %v1319 = vadd.f32 0.0, %v1318
        %v1320 = vpop.f32.mrf.mxu0
        %1321 = vmatprep.mubr.f32.mxu0 0.0
        %1322 = vmatmul.mubr.f32.gmra.mxu0 %v1188
        %v1323 = vpop.f32.mrf.mxu0
        %v1324 = vadd.f32 0.0, %v1323
        %v1325 = vpop.f32.mrf.mxu0
        %1326 = vmatprep.mubr.f32.mxu0 0.0
        %1327 = vmatmul.mubr.f32.gmra.mxu0 %v1191
        %v1328 = vpop.f32.mrf.mxu0
        %v1329 = vadd.f32 0.0, %v1328
        %v1330 = vpop.f32.mrf.mxu0
        %1331 = vmatprep.mubr.f32.mxu0 0.0
        %1332 = vmatmul.mubr.f32.gmra.mxu0 %v1194
        %v1333 = vpop.f32.mrf.mxu0
        %v1334 = vadd.f32 0.0, %v1333
        %v1335 = vpop.f32.mrf.mxu0
        %1336 = vmatprep.mubr.f32.mxu0 0.0
        %1337 = vmatmul.mubr.f32.gmra.mxu0 %v1197
        %v1338 = vpop.f32.mrf.mxu0
        %v1339 = vadd.f32 0.0, %v1338
        %v1340 = vpop.f32.mrf.mxu0
        %1341 = vmatprep.mubr.f32.mxu0 0.0
        %1342 = vmatmul.mubr.f32.gmra.mxu0 %v1200
        %v1343 = vpop.f32.mrf.mxu0
        %v1344 = vadd.f32 0.0, %v1343
        %v1345 = vpop.f32.mrf.mxu0
        %1346 = vdwg.mxu0
        %v1347 = vmax.f32 %v1269, 1e-30
        %v1348 = vmax.f32 %v1274, 1e-30
        %v1349 = vmax.f32 %v1279, 1e-30
        %v1350 = vmax.f32 %v1284, 1e-30
        %v1351 = vmax.f32 %v1289, 1e-30
        %v1352 = vmax.f32 %v1294, 1e-30
        %v1353 = vmax.f32 %v1299, 1e-30
        %v1354 = vmax.f32 %v1304, 1e-30
        %v1355 = vmax.f32 %v1309, 1e-30
        %v1356 = vmax.f32 %v1314, 1e-30
        %v1357 = vmax.f32 %v1319, 1e-30
        %v1358 = vmax.f32 %v1324, 1e-30
        %v1359 = vmax.f32 %v1329, 1e-30
        %v1360 = vmax.f32 %v1334, 1e-30
        %v1361 = vmax.f32 %v1339, 1e-30
        %v1362 = vmax.f32 %v1344, 1e-30
        %v1363 = vrcp.pop %v1347
        %v1364 = vrcp.pop %v1348
        %v1365 = vrcp.pop %v1349
        %v1366 = vrcp.pop %v1350
        %v1367 = vrcp.pop %v1351
        %v1368 = vrcp.pop %v1352
        %v1369 = vrcp.pop %v1353
        %v1370 = vrcp.pop %v1354
        %v1371 = vrcp.pop %v1355
        %v1372 = vrcp.pop %v1356
        %v1373 = vrcp.pop %v1357
        %v1374 = vrcp.pop %v1358
        %v1375 = vrcp.pop %v1359
        %v1376 = vrcp.pop %v1360
        %v1377 = vrcp.pop %v1361
        %v1378 = vrcp.pop %v1362
        %v1379 = vmul.f32 %v1119, %v1363
        %v1380 = vmul.f32 %v1121, %v1364
        %v1381 = vmul.f32 %v1123, %v1365
        %v1382 = vmul.f32 %v1125, %v1366
        %v1383 = vmul.f32 %v1127, %v1367
        %v1384 = vmul.f32 %v1129, %v1368
        %v1385 = vmul.f32 %v1131, %v1369
        %v1386 = vmul.f32 %v1133, %v1370
        %v1387 = vmul.f32 %v1135, %v1371
        %v1388 = vmul.f32 %v1137, %v1372
        %v1389 = vmul.f32 %v1139, %v1373
        %v1390 = vmul.f32 %v1141, %v1374
        %v1391 = vmul.f32 %v1143, %v1375
        %v1392 = vmul.f32 %v1145, %v1376
        %v1393 = vmul.f32 %v1147, %v1377
        %v1394 = vmul.f32 %v1149, %v1378
        %v1395 = vmax.f32 %v1379, 0.001
        %v1396 = vmax.f32 %v1380, 0.001
        %v1397 = vmax.f32 %v1381, 0.001
        %v1398 = vmax.f32 %v1382, 0.001
        %v1399 = vmax.f32 %v1383, 0.001
        %v1400 = vmax.f32 %v1384, 0.001
        %v1401 = vmax.f32 %v1385, 0.001
        %v1402 = vmax.f32 %v1386, 0.001
        %v1403 = vmax.f32 %v1387, 0.001
        %v1404 = vmax.f32 %v1388, 0.001
        %v1405 = vmax.f32 %v1389, 0.001
        %v1406 = vmax.f32 %v1390, 0.001
        %v1407 = vmax.f32 %v1391, 0.001
        %v1408 = vmax.f32 %v1392, 0.001
        %v1409 = vmax.f32 %v1393, 0.001
        %v1410 = vmax.f32 %v1394, 0.001
        %v1411 = vld [vmem:[%s8] sm:$0xff]
        %v1412 = vld [vmem:[%s8 + $0x8] sm:$0xff]
        %v1413 = vld [vmem:[%s8 + $0x10] sm:$0xff]
        %v1414 = vld [vmem:[%s8 + $0x18] sm:$0xff]
        %v1416 = vsel %vm1053, %v1395, 0
        %v1419 = vsel %vm1053, %v1396, 0
        %v1422 = vsel %vm1053, %v1397, 0
        %v1425 = vsel %vm1053, %v1398, 0
        %v1428 = vsel %vm1053, %v1399, 0
        %v1431 = vsel %vm1053, %v1400, 0
        %v1434 = vsel %vm1053, %v1401, 0
        %v1437 = vsel %vm1053, %v1402, 0
        %v1440 = vsel %vm1053, %v1403, 0
        %v1443 = vsel %vm1053, %v1404, 0
        %v1446 = vsel %vm1053, %v1405, 0
        %v1449 = vsel %vm1053, %v1406, 0
        %v1452 = vsel %vm1053, %v1407, 0
        %v1455 = vsel %vm1053, %v1408, 0
        %v1458 = vsel %vm1053, %v1409, 0
        %v1461 = vsel %vm1053, %v1410, 0
        %1463 = vmatprep.subr.mxu0 0.0
        %1464 = vmatpush1.msra.mxu0 0.0
        %1465 = vmatprep.subr.mxu0 0.0
        %1466 = vmatpush1.msra.mxu0 0.0
        %1467 = vmatprep.subr.mxu0 0.0
        %1468 = vmatpush1.msra.mxu0 0.0
        %1469 = vmatprep.subr.mxu0 0.0
        %1470 = vmatpush1.msra.mxu0 0.0
        %1471 = vmatprep.subr.mxu0 0.0
        %1472 = vmatpush1.msra.mxu0 0.0
        %1473 = vmatprep.subr.mxu0 0.0
        %1474 = vmatpush1.msra.mxu0 0.0
        %1475 = vmatprep.subr.mxu0 0.0
        %1476 = vmatpush1.msra.mxu0 0.0
        %1477 = vmatprep.subr.mxu0 0.0
        %1478 = vmatpush1.msra.mxu0 0.0
        %1479 = vmatprep.subr.mxu0 0.0
        %1480 = vmatpush1.msra.mxu0 0.0
        %1481 = vmatprep.subr.mxu0 0.0
        %1482 = vmatpush1.msra.mxu0 0.0
        %1483 = vmatprep.subr.mxu0 0.0
        %1484 = vmatpush1.msra.mxu0 0.0
        %1485 = vmatprep.subr.mxu0 0.0
        %1486 = vmatpush1.msra.mxu0 0.0
        %1487 = vmatprep.subr.mxu0 0.0
        %1488 = vmatpush1.msra.mxu0 %v1414
        %1489 = vmatprep.subr.mxu0 0.0
        %1490 = vmatpush1.msra.mxu0 %v1413
        %1491 = vmatprep.subr.mxu0 0.0
        %1492 = vmatpush1.msra.mxu0 %v1412
        %1493 = vmatprep.subr.mxu0 0.0
        %1494 = vmatpush1.msra.mxu0 %v1411
        %1495 = vmatprep.subr.mxu0 0.0
        %1496 = vmatpush2.msra.mxu0 0.0
        %1497 = vmatprep.subr.mxu0 0.0
        %1498 = vmatpush2.msra.mxu0 0.0
        %1499 = vmatprep.subr.mxu0 0.0
        %1500 = vmatpush2.msra.mxu0 0.0
        %1501 = vmatprep.subr.mxu0 0.0
        %1502 = vmatpush2.msra.mxu0 0.0
        %1503 = vmatprep.subr.mxu0 0.0
        %1504 = vmatpush2.msra.mxu0 0.0
        %1505 = vmatprep.subr.mxu0 0.0
        %1506 = vmatpush2.msra.mxu0 0.0
        %1507 = vmatprep.subr.mxu0 0.0
        %1508 = vmatpush2.msra.mxu0 0.0
        %1509 = vmatprep.subr.mxu0 0.0
        %1510 = vmatpush2.msra.mxu0 0.0
        %1511 = vmatprep.subr.mxu0 0.0
        %1512 = vmatpush2.msra.mxu0 0.0
        %1513 = vmatprep.subr.mxu0 0.0
        %1514 = vmatpush2.msra.mxu0 0.0
        %1515 = vmatprep.subr.mxu0 0.0
        %1516 = vmatpush2.msra.mxu0 0.0
        %1517 = vmatprep.subr.mxu0 0.0
        %1518 = vmatpush2.msra.mxu0 0.0
        %1519 = vmatprep.subr.mxu0 0.0
        %1520 = vmatpush2.msra.mxu0 0.0
        %1521 = vmatprep.subr.mxu0 0.0
        %1522 = vmatpush2.msra.mxu0 0.0
        %1523 = vmatprep.subr.mxu0 0.0
        %1524 = vmatpush2.msra.mxu0 0.0
        %1525 = vmatprep.subr.mxu0 0.0
        %1526 = vmatpush2.msra.mxu0 0.0
        %1527 = vmatprep.mubr.f32.mxu0 0.0
        %1528 = vmatmul.mubr.f32.gmra.mxu0 %v1416
        %v1529 = vpop.f32.mrf.mxu0
        %v1530 = vadd.f32 0.0, %v1529
        %v1531 = vpop.f32.mrf.mxu0
        %1532 = vmatprep.mubr.f32.mxu0 0.0
        %1533 = vmatmul.mubr.f32.gmra.mxu0 %v1419
        %v1534 = vpop.f32.mrf.mxu0
        %v1535 = vadd.f32 0.0, %v1534
        %v1536 = vpop.f32.mrf.mxu0
        %1537 = vmatprep.mubr.f32.mxu0 0.0
        %1538 = vmatmul.mubr.f32.gmra.mxu0 %v1422
        %v1539 = vpop.f32.mrf.mxu0
        %v1540 = vadd.f32 0.0, %v1539
        %v1541 = vpop.f32.mrf.mxu0
        %1542 = vmatprep.mubr.f32.mxu0 0.0
        %1543 = vmatmul.mubr.f32.gmra.mxu0 %v1425
        %v1544 = vpop.f32.mrf.mxu0
        %v1545 = vadd.f32 0.0, %v1544
        %v1546 = vpop.f32.mrf.mxu0
        %1547 = vmatprep.mubr.f32.mxu0 0.0
        %1548 = vmatmul.mubr.f32.gmra.mxu0 %v1428
        %v1549 = vpop.f32.mrf.mxu0
        %v1550 = vadd.f32 0.0, %v1549
        %v1551 = vpop.f32.mrf.mxu0
        %1552 = vmatprep.mubr.f32.mxu0 0.0
        %1553 = vmatmul.mubr.f32.gmra.mxu0 %v1431
        %v1554 = vpop.f32.mrf.mxu0
        %v1555 = vadd.f32 0.0, %v1554
        %v1556 = vpop.f32.mrf.mxu0
        %1557 = vmatprep.mubr.f32.mxu0 0.0
        %1558 = vmatmul.mubr.f32.gmra.mxu0 %v1434
        %v1559 = vpop.f32.mrf.mxu0
        %v1560 = vadd.f32 0.0, %v1559
        %v1561 = vpop.f32.mrf.mxu0
        %1562 = vmatprep.mubr.f32.mxu0 0.0
        %1563 = vmatmul.mubr.f32.gmra.mxu0 %v1437
        %v1564 = vpop.f32.mrf.mxu0
        %v1565 = vadd.f32 0.0, %v1564
        %v1566 = vpop.f32.mrf.mxu0
        %1567 = vmatprep.mubr.f32.mxu0 0.0
        %1568 = vmatmul.mubr.f32.gmra.mxu0 %v1440
        %v1569 = vpop.f32.mrf.mxu0
        %v1570 = vadd.f32 0.0, %v1569
        %v1571 = vpop.f32.mrf.mxu0
        %1572 = vmatprep.mubr.f32.mxu0 0.0
        %1573 = vmatmul.mubr.f32.gmra.mxu0 %v1443
        %v1574 = vpop.f32.mrf.mxu0
        %v1575 = vadd.f32 0.0, %v1574
        %v1576 = vpop.f32.mrf.mxu0
        %1577 = vmatprep.mubr.f32.mxu0 0.0
        %1578 = vmatmul.mubr.f32.gmra.mxu0 %v1446
        %v1579 = vpop.f32.mrf.mxu0
        %v1580 = vadd.f32 0.0, %v1579
        %v1581 = vpop.f32.mrf.mxu0
        %1582 = vmatprep.mubr.f32.mxu0 0.0
        %1583 = vmatmul.mubr.f32.gmra.mxu0 %v1449
        %v1584 = vpop.f32.mrf.mxu0
        %v1585 = vadd.f32 0.0, %v1584
        %v1586 = vpop.f32.mrf.mxu0
        %1587 = vmatprep.mubr.f32.mxu0 0.0
        %1588 = vmatmul.mubr.f32.gmra.mxu0 %v1452
        %v1589 = vpop.f32.mrf.mxu0
        %v1590 = vadd.f32 0.0, %v1589
        %v1591 = vpop.f32.mrf.mxu0
        %1592 = vmatprep.mubr.f32.mxu0 0.0
        %1593 = vmatmul.mubr.f32.gmra.mxu0 %v1455
        %v1594 = vpop.f32.mrf.mxu0
        %v1595 = vadd.f32 0.0, %v1594
        %v1596 = vpop.f32.mrf.mxu0
        %1597 = vmatprep.mubr.f32.mxu0 0.0
        %1598 = vmatmul.mubr.f32.gmra.mxu0 %v1458
        %v1599 = vpop.f32.mrf.mxu0
        %v1600 = vadd.f32 0.0, %v1599
        %v1601 = vpop.f32.mrf.mxu0
        %1602 = vmatprep.mubr.f32.mxu0 0.0
        %1603 = vmatmul.mubr.f32.gmra.mxu0 %v1461
        %v1604 = vpop.f32.mrf.mxu0
        %v1605 = vadd.f32 0.0, %v1604
        %v1606 = vpop.f32.mrf.mxu0
        %1607 = vdwg.mxu0
        %1608 = vst [vmem:[%s326] sm:$0xff] %v1530
        %1609 = vst [vmem:[%s326 + $0x8] sm:$0xff] %v1535
        %1610 = vst [vmem:[%s326 + $0x10] sm:$0xff] %v1540
        %1611 = vst [vmem:[%s326 + $0x18] sm:$0xff] %v1545
        %1612 = vst [vmem:[%s326 + $0x20] sm:$0xff] %v1550
        %1613 = vst [vmem:[%s326 + $0x28] sm:$0xff] %v1555
        %1614 = vst [vmem:[%s326 + $0x30] sm:$0xff] %v1560
        %1615 = vst [vmem:[%s326 + $0x38] sm:$0xff] %v1565
        %1616 = vst [vmem:[%s326 + $0x40] sm:$0xff] %v1570
        %1617 = vst [vmem:[%s326 + $0x48] sm:$0xff] %v1575
        %1618 = vst [vmem:[%s326 + $0x50] sm:$0xff] %v1580
        %1619 = vst [vmem:[%s326 + $0x58] sm:$0xff] %v1585
        %1620 = vst [vmem:[%s326 + $0x60] sm:$0xff] %v1590
        %1621 = vst [vmem:[%s326 + $0x68] sm:$0xff] %v1595
        %1622 = vst [vmem:[%s326 + $0x70] sm:$0xff] %v1600
        %1623 = vst [vmem:[%s326 + $0x78] sm:$0xff] %v1605
        %s1624 = sand.u32 %s225, 1
        %s1625 = scalar_lea.sflag [#allocation3], %s1624
        %s1626 = sand.u32 %s225, 1
        %s1627 = smul.addr %s1626, 128
        %s1628 = scalar_lea.vmem [#allocation2], %s1627
        // Predicated region
        $region57: #{tpu_custom_call.1} parent=55 // pred_check
          %p1629 = pneg %p235
        $region58: #{tpu_custom_call.1} parent=55 // pred_check_branch
          %1631 = sbr.rel (%p1629) target = $region60
        $region59: #{tpu_custom_call.1} parent=55 // pred_region
          %s1632 = smul.u32 16, %s23
          %s1634 = ssub.s32 2048, 2048
          %1635 = vsyncadd %s1625, %s1634
          %s1636 = smul.addr %s1632, 128
          %s1637 = scalar_lea.hbm %s9, %s1636
          %s1638 = sshll.u32 %s1628, 4
          %s1639 = int_to_ptr.vmem [resolvable:$true] %s1638
          %1644 = dma.vmem_to_hbm [thread:$0]  %s1639, 2048, %s1637, %s1625, 128, 128, 8
        $region60: #{tpu_custom_call.1} parent=55 // pred_fallthru
          _
      $region56: #{tpu_custom_call.1} parent=5 // pred_fallthru
        _
      %p1645 = scmp.le.s32.totalorder 2, %s18
      // Predicated region
      $region61: #{tpu_custom_call.1} parent=5 // pred_check
        %p1646 = pneg %p1645
      $region62: #{tpu_custom_call.1} parent=5 // pred_check_branch
        %1648 = sbr.rel (%p1646) target = $region64
      $region63: #{tpu_custom_call.1} parent=5 // pred_region
        %s1649 = ssub.s32 %s18, 2
        // Predicated region
        $region65: #{tpu_custom_call.1} parent=63 // pred_check
          %p1650 = pneg %p241
        $region66: #{tpu_custom_call.1} parent=63 // pred_check_branch
          %1652 = sbr.rel (%p1650) target = $region68
        $region67: #{tpu_custom_call.1} parent=63 // pred_region
          %s1653 = sand.u32 %s226, 1
          %s1654 = scalar_lea.sflag [#allocation3], %s1653
          %s1655 = sand.u32 %s226, 1
          %s1656 = smul.addr %s1655, 128
          %s1657 = scalar_lea.vmem [#allocation2], %s1656
          %1658 = dma.done %s1654, 2048
        $region68: #{tpu_custom_call.1} parent=63 // pred_fallthru
          _
      $region64: #{tpu_custom_call.1} parent=5 // pred_fallthru
        _
    $region6: #{tpu_custom_call.1} parent=1 // loop_footer
      %s22 = sadd.s32 1, %s18
    $region7: #{tpu_custom_call.1} parent=1 // loop_footer_branch
      %17 = sbr.rel target = $region3
    $region8: #{tpu_custom_call.1} parent=1 // loop_exit
      _
    %1659 = vsyncpa [#allocation3], 1
    %s1660 = scalar_lea.sflag [#allocation3], 1
    %1661 = vsyncpa %s1660, 1

</llo_original>
